<compile_context>
chip_gen: v7x
topology: tpu7x:2x2x1
jax: 0.10.0
libtpu: 0.0.40
codegen_flags: <defaults>
</compile_context>

<pallas_src>
import functools

import jax
import jax.numpy as jnp
from jax.experimental import pallas as pl
from jax.experimental.pallas import tpu as pltpu

K_IN = 28 * 28        # 784
K_PAD = 896           # 7 * 128
HID = 64
N_OUT = 10
OUT_PAD = 128         # lane-dense output block


def mlp_kernel(x_ref, w1_ref, b1_ref, w2_ref, b2_ref, w3_ref, b3_ref,
               w4_ref, b4_ref, o_ref):
    # fc1 + relu  (bf16 matmul inputs, f32 accumulation / elementwise)
    h = jnp.dot(x_ref[...], w1_ref[...], preferred_element_type=jnp.float32)
    h = jnp.maximum(h + b1_ref[...], 0.0)
    # fc2 + relu
    h = jnp.dot(h.astype(jnp.bfloat16), w2_ref[...],
                preferred_element_type=jnp.float32)
    h = jnp.maximum(h + b2_ref[...], 0.0)
    # fc3 + relu
    h = jnp.dot(h.astype(jnp.bfloat16), w3_ref[...],
                preferred_element_type=jnp.float32)
    h = jnp.maximum(h + b3_ref[...], 0.0)
    # fc4 (no activation); padded output columns carry a -1e30 bias so they
    # contribute exp(...) == 0 to the softmax normalization.
    z = jnp.dot(h.astype(jnp.bfloat16), w4_ref[...],
                preferred_element_type=jnp.float32)
    z = z + b4_ref[...]
    # log_softmax over the feature axis (f32)
    m = jnp.max(z, axis=1, keepdims=True)
    lse = jnp.log(jnp.sum(jnp.exp(z - m), axis=1, keepdims=True)) + m
    o_ref[...] = z - lse


@functools.partial(jax.jit, static_argnames=("tile_b",))
def net_forward(x, params, *, tile_b=256):
    """x: [B, 784] float32. params: dict of weights/biases. Returns [B, 10] f32."""
    B = x.shape[0]

    # --- wrapper-side layout prep ---------------------------------------
    # pad K: 784 -> 896 (zeros), pad batch to a multiple of tile_b, cast to bf16
    x_p = jnp.pad(x, ((0, 0), (0, K_PAD - K_IN)))
    n_tiles = pl.cdiv(B, tile_b)
    b_pad = n_tiles * tile_b
    if b_pad != B:
        x_p = jnp.pad(x_p, ((0, b_pad - B), (0, 0)))
    x_bf = x_p.astype(jnp.bfloat16)

    w1 = jnp.pad(params["w1"], ((0, K_PAD - K_IN), (0, 0))).astype(jnp.bfloat16)
    w2 = params["w2"].astype(jnp.bfloat16)
    w3 = params["w3"].astype(jnp.bfloat16)
    w4 = jnp.pad(params["w4"], ((0, 0), (0, OUT_PAD - N_OUT))).astype(jnp.bfloat16)
    b1 = params["b1"]
    b2 = params["b2"]
    b3 = params["b3"]
    # padded logit columns get a huge negative bias -> exp() underflows to 0
    b4 = jnp.pad(params["b4"], ((0, 0), (0, OUT_PAD - N_OUT)),
                 constant_values=-1e30)

    const = lambda i: (0, 0)   # weights / biases: same block every grid step
    out = pl.pallas_call(
        mlp_kernel,
        out_shape=jax.ShapeDtypeStruct((b_pad, OUT_PAD), jnp.float32),
        grid=(n_tiles,),
        in_specs=[
            pl.BlockSpec((tile_b, K_PAD), lambda i: (i, 0)),   # x tile
            pl.BlockSpec((K_PAD, HID), const),                 # w1 (resident)
            pl.BlockSpec((1, HID), const),                     # b1
            pl.BlockSpec((HID, HID), const),                   # w2
            pl.BlockSpec((1, HID), const),                     # b2
            pl.BlockSpec((HID, HID), const),                   # w3
            pl.BlockSpec((1, HID), const),                     # b3
            pl.BlockSpec((HID, OUT_PAD), const),               # w4 (padded)
            pl.BlockSpec((1, OUT_PAD), const),                 # b4 (padded)
        ],
        out_specs=pl.BlockSpec((tile_b, OUT_PAD), lambda i: (i, 0)),
        compiler_params=pltpu.CompilerParams(
            dimension_semantics=("parallel",)),
    )(x_bf, w1, b1, w2, b2, w3, b3, w4, b4)

    return out[:B, :N_OUT]


def init_params(key):
    """Deterministic parameter init. Weights stored as [in, out]."""
    shapes = [(K_IN, HID), (HID, HID), (HID, HID), (HID, N_OUT)]
    params = {}
    keys = jax.random.split(key, 2 * len(shapes))
    for i, (fan_in, fan_out) in enumerate(shapes):
        bound = 1.0 / jnp.sqrt(fan_in)  # PyTorch nn.Linear default init scale
        kw, kb = keys[2 * i], keys[2 * i + 1]
        params[f"w{i+1}"] = jax.random.uniform(
            kw, (fan_in, fan_out), jnp.float32, -bound, bound)
        # biases kept 2D [1, out] for TPU-friendly layouts
        params[f"b{i+1}"] = jax.random.uniform(
            kb, (1, fan_out), jnp.float32, -bound, bound)
    return params


def reference_forward(x, params):
    """Pure-JAX reference that mirrors the kernel's bf16-input / f32-accum math."""
    def bdot(a, w):
        return jnp.dot(a.astype(jnp.bfloat16).astype(jnp.float32),
                       w.astype(jnp.bfloat16).astype(jnp.float32))
    h = jnp.maximum(bdot(x, params["w1"]) + params["b1"], 0.0)
    h = jnp.maximum(bdot(h, params["w2"]) + params["b2"], 0.0)
    h = jnp.maximum(bdot(h, params["w3"]) + params["b3"], 0.0)
    z = bdot(h, params["w4"]) + params["b4"]
    m = jnp.max(z, axis=1, keepdims=True)
    lse = jnp.log(jnp.sum(jnp.exp(z - m), axis=1, keepdims=True)) + m
    return z - lse


if __name__ == "__main__":
    key = jax.random.PRNGKey(0)
    pkey, xkey = jax.random.split(key)
    params = init_params(pkey)

    # small test: B not a multiple of the tile -> exercises batch padding,
    # multiple grid steps, and the K / output-lane padding paths.
    B = 260
    x = jax.random.normal(xkey, (B, K_IN), dtype=jnp.float32)

    out = net_forward(x, params, tile_b=128)
    out = jax.block_until_ready(out)

    assert out.shape == (B, N_OUT)
    assert bool(jnp.all(jnp.isfinite(out)))

    # log_softmax rows should logsumexp to ~0
    row_lse = jax.scipy.special.logsumexp(out, axis=1)
    assert bool(jnp.all(jnp.abs(row_lse) < 1e-3))

    # match the bf16-input / f32-accum reference
    ref = reference_forward(x, params)
    assert bool(jnp.all(jnp.abs(out - ref) < 1e-2))

    print("KERNEL_OK")
</pallas_src>

<mosaic_0001>
module attributes {stable_mosaic.version = 11 : i64} {
  func.func @mlp_kernel(%arg0: i32, %arg1: memref<128x896xbf16, #tpu.memory_space<vmem>>, %arg2: memref<896x64xbf16, #tpu.memory_space<vmem>>, %arg3: memref<1x64xf32, #tpu.memory_space<vmem>>, %arg4: memref<64x64xbf16, #tpu.memory_space<vmem>>, %arg5: memref<1x64xf32, #tpu.memory_space<vmem>>, %arg6: memref<64x64xbf16, #tpu.memory_space<vmem>>, %arg7: memref<1x64xf32, #tpu.memory_space<vmem>>, %arg8: memref<64x128xbf16, #tpu.memory_space<vmem>>, %arg9: memref<1x128xf32, #tpu.memory_space<vmem>>, %arg10: memref<128x128xf32, #tpu.memory_space<vmem>>) attributes {dimension_semantics = [#tpu.dimension_semantics<parallel>], iteration_bounds = array<i64: 3>, scalar_prefetch = 0 : i64, scratch_operands = 0 : i64, tpu.core_type = #tpu.core_type<tc>, window_params = [{transform_indices = @transform_0, window_bounds = array<i64: 128, 896>}, {pipeline_mode = #tpu.pipeline_mode<synchronous>, transform_indices = @transform_1, window_bounds = array<i64: 896, 64>}, {pipeline_mode = #tpu.pipeline_mode<synchronous>, transform_indices = @transform_2, window_bounds = array<i64: 1, 64>}, {pipeline_mode = #tpu.pipeline_mode<synchronous>, transform_indices = @transform_3, window_bounds = array<i64: 64, 64>}, {pipeline_mode = #tpu.pipeline_mode<synchronous>, transform_indices = @transform_4, window_bounds = array<i64: 1, 64>}, {pipeline_mode = #tpu.pipeline_mode<synchronous>, transform_indices = @transform_5, window_bounds = array<i64: 64, 64>}, {pipeline_mode = #tpu.pipeline_mode<synchronous>, transform_indices = @transform_6, window_bounds = array<i64: 1, 64>}, {pipeline_mode = #tpu.pipeline_mode<synchronous>, transform_indices = @transform_7, window_bounds = array<i64: 64, 128>}, {pipeline_mode = #tpu.pipeline_mode<synchronous>, transform_indices = @transform_8, window_bounds = array<i64: 1, 128>}, {transform_indices = @transform_9, window_bounds = array<i64: 128, 128>}]} {
    %c0 = arith.constant 0 : index
    %c0_0 = arith.constant 0 : index
    %0 = vector.load %arg1[%c0, %c0_0] : memref<128x896xbf16, #tpu.memory_space<vmem>>, vector<128x896xbf16>
    %c0_1 = arith.constant 0 : index
    %c0_2 = arith.constant 0 : index
    %1 = vector.load %arg2[%c0_1, %c0_2] : memref<896x64xbf16, #tpu.memory_space<vmem>>, vector<896x64xbf16>
    %cst = arith.constant dense<0.000000e+00> : vector<128x64xf32>
    %2 = tpu.matmul %0, %1, %cst {dimension_numbers = #tpu.dot_dimension_numbers<[1], [0], [0], [1], [0, 0, 1, 1], [], []>} : vector<128x896xbf16>, vector<896x64xbf16>, vector<128x64xf32> -> vector<128x64xf32>
    %c0_3 = arith.constant 0 : index
    %c0_4 = arith.constant 0 : index
    %3 = vector.load %arg3[%c0_3, %c0_4] : memref<1x64xf32, #tpu.memory_space<vmem>>, vector<1x64xf32>
    %4 = vector.broadcast %3 : vector<1x64xf32> to vector<128x64xf32>
    %5 = arith.addf %2, %4 : vector<128x64xf32>
    %cst_5 = arith.constant 0.000000e+00 : f32
    %6 = vector.broadcast %cst_5 : f32 to vector<128x64xf32>
    %7 = arith.maximumf %5, %6 : vector<128x64xf32>
    %8 = arith.truncf %7 : vector<128x64xf32> to vector<128x64xbf16>
    %c0_6 = arith.constant 0 : index
    %c0_7 = arith.constant 0 : index
    %9 = vector.load %arg4[%c0_6, %c0_7] : memref<64x64xbf16, #tpu.memory_space<vmem>>, vector<64x64xbf16>
    %cst_8 = arith.constant dense<0.000000e+00> : vector<128x64xf32>
    %10 = tpu.matmul %8, %9, %cst_8 {dimension_numbers = #tpu.dot_dimension_numbers<[1], [0], [0], [1], [0, 0, 1, 1], [], []>} : vector<128x64xbf16>, vector<64x64xbf16>, vector<128x64xf32> -> vector<128x64xf32>
    %c0_9 = arith.constant 0 : index
    %c0_10 = arith.constant 0 : index
    %11 = vector.load %arg5[%c0_9, %c0_10] : memref<1x64xf32, #tpu.memory_space<vmem>>, vector<1x64xf32>
    %12 = vector.broadcast %11 : vector<1x64xf32> to vector<128x64xf32>
    %13 = arith.addf %10, %12 : vector<128x64xf32>
    %cst_11 = arith.constant 0.000000e+00 : f32
    %14 = vector.broadcast %cst_11 : f32 to vector<128x64xf32>
    %15 = arith.maximumf %13, %14 : vector<128x64xf32>
    %16 = arith.truncf %15 : vector<128x64xf32> to vector<128x64xbf16>
    %c0_12 = arith.constant 0 : index
    %c0_13 = arith.constant 0 : index
    %17 = vector.load %arg6[%c0_12, %c0_13] : memref<64x64xbf16, #tpu.memory_space<vmem>>, vector<64x64xbf16>
    %cst_14 = arith.constant dense<0.000000e+00> : vector<128x64xf32>
    %18 = tpu.matmul %16, %17, %cst_14 {dimension_numbers = #tpu.dot_dimension_numbers<[1], [0], [0], [1], [0, 0, 1, 1], [], []>} : vector<128x64xbf16>, vector<64x64xbf16>, vector<128x64xf32> -> vector<128x64xf32>
    %c0_15 = arith.constant 0 : index
    %c0_16 = arith.constant 0 : index
    %19 = vector.load %arg7[%c0_15, %c0_16] : memref<1x64xf32, #tpu.memory_space<vmem>>, vector<1x64xf32>
    %20 = vector.broadcast %19 : vector<1x64xf32> to vector<128x64xf32>
    %21 = arith.addf %18, %20 : vector<128x64xf32>
    %cst_17 = arith.constant 0.000000e+00 : f32
    %22 = vector.broadcast %cst_17 : f32 to vector<128x64xf32>
    %23 = arith.maximumf %21, %22 : vector<128x64xf32>
    %24 = arith.truncf %23 : vector<128x64xf32> to vector<128x64xbf16>
    %c0_18 = arith.constant 0 : index
    %c0_19 = arith.constant 0 : index
    %25 = vector.load %arg8[%c0_18, %c0_19] : memref<64x128xbf16, #tpu.memory_space<vmem>>, vector<64x128xbf16>
    %cst_20 = arith.constant dense<0.000000e+00> : vector<128x128xf32>
    %26 = tpu.matmul %24, %25, %cst_20 {dimension_numbers = #tpu.dot_dimension_numbers<[1], [0], [0], [1], [0, 0, 1, 1], [], []>} : vector<128x64xbf16>, vector<64x128xbf16>, vector<128x128xf32> -> vector<128x128xf32>
    %c0_21 = arith.constant 0 : index
    %c0_22 = arith.constant 0 : index
    %27 = vector.load %arg9[%c0_21, %c0_22] : memref<1x128xf32, #tpu.memory_space<vmem>>, vector<1x128xf32>
    %28 = vector.broadcast %27 : vector<1x128xf32> to vector<128x128xf32>
    %29 = arith.addf %26, %28 : vector<128x128xf32>
    %cst_23 = arith.constant dense<0xFF800000> : vector<128xf32>
    %30 = vector.multi_reduction <maximumf>, %29, %cst_23 [1] : vector<128x128xf32> to vector<128xf32>
    %31 = vector.shape_cast %30 : vector<128xf32> to vector<128x1xf32>
    %32 = vector.broadcast %31 : vector<128x1xf32> to vector<128x128xf32>
    %33 = arith.subf %29, %32 : vector<128x128xf32>
    %34 = math.exp %33 : vector<128x128xf32>
    %cst_24 = arith.constant dense<0.000000e+00> : vector<128xf32>
    %35 = vector.multi_reduction <add>, %34, %cst_24 [1] : vector<128x128xf32> to vector<128xf32>
    %36 = vector.shape_cast %35 : vector<128xf32> to vector<128x1xf32>
    %37 = math.log %36 : vector<128x1xf32>
    %38 = arith.addf %37, %31 : vector<128x1xf32>
    %39 = vector.broadcast %38 : vector<128x1xf32> to vector<128x128xf32>
    %40 = arith.subf %29, %39 : vector<128x128xf32>
    %c0_25 = arith.constant 0 : index
    %c0_26 = arith.constant 0 : index
    %41 = vector.load %arg10[%c0_25, %c0_26] : memref<128x128xf32, #tpu.memory_space<vmem>>, vector<128x128xf32>
    tpu.vector_store %arg10[%c0_25, %c0_26], %40 {strides = array<i32>} : memref<128x128xf32, #tpu.memory_space<vmem>>, vector<128x128xf32>,
    return
  }
  func.func @transform_0(%arg0: i32) -> (i32, i32) {
    %c0_i32 = arith.constant 0 : i32
    %c0_i32_0 = arith.constant 0 : i32
    return %arg0, %c0_i32 : i32, i32
  }
  func.func @transform_1(%arg0: i32) -> (i32, i32) {
    %c0_i32 = arith.constant 0 : i32
    %c0_i32_0 = arith.constant 0 : i32
    %c0_i32_1 = arith.constant 0 : i32
    return %c0_i32, %c0_i32_0 : i32, i32
  }
  func.func @transform_2(%arg0: i32) -> (i32, i32) {
    %c0_i32 = arith.constant 0 : i32
    %c0_i32_0 = arith.constant 0 : i32
    %c0_i32_1 = arith.constant 0 : i32
    return %c0_i32, %c0_i32_0 : i32, i32
  }
  func.func @transform_3(%arg0: i32) -> (i32, i32) {
    %c0_i32 = arith.constant 0 : i32
    %c0_i32_0 = arith.constant 0 : i32
    %c0_i32_1 = arith.constant 0 : i32
    return %c0_i32, %c0_i32_0 : i32, i32
  }
  func.func @transform_4(%arg0: i32) -> (i32, i32) {
    %c0_i32 = arith.constant 0 : i32
    %c0_i32_0 = arith.constant 0 : i32
    %c0_i32_1 = arith.constant 0 : i32
    return %c0_i32, %c0_i32_0 : i32, i32
  }
  func.func @transform_5(%arg0: i32) -> (i32, i32) {
    %c0_i32 = arith.constant 0 : i32
    %c0_i32_0 = arith.constant 0 : i32
    %c0_i32_1 = arith.constant 0 : i32
    return %c0_i32, %c0_i32_0 : i32, i32
  }
  func.func @transform_6(%arg0: i32) -> (i32, i32) {
    %c0_i32 = arith.constant 0 : i32
    %c0_i32_0 = arith.constant 0 : i32
    %c0_i32_1 = arith.constant 0 : i32
    return %c0_i32, %c0_i32_0 : i32, i32
  }
  func.func @transform_7(%arg0: i32) -> (i32, i32) {
    %c0_i32 = arith.constant 0 : i32
    %c0_i32_0 = arith.constant 0 : i32
    %c0_i32_1 = arith.constant 0 : i32
    return %c0_i32, %c0_i32_0 : i32, i32
  }
  func.func @transform_8(%arg0: i32) -> (i32, i32) {
    %c0_i32 = arith.constant 0 : i32
    %c0_i32_0 = arith.constant 0 : i32
    %c0_i32_1 = arith.constant 0 : i32
    return %c0_i32, %c0_i32_0 : i32, i32
  }
  func.func @transform_9(%arg0: i32) -> (i32, i32) {
    %c0_i32 = arith.constant 0 : i32
    %c0_i32_0 = arith.constant 0 : i32
    return %arg0, %c0_i32 : i32, i32
  }
}

</mosaic_0001>

<llo_original>
// kernel: net_forward.1
$region0: #{net_forward.1}
  #allocation0 [shape = 'u32[]', space=smem, size = 0x4, offset = 0x4, fixed_abs, tag = 'smem constant byte address 0x4 - core index']
  #allocation1 [shape = 'u32[144,128]{1,0:T(1,128)}', space=vmem, size = 0x12000, scoped, tag = 'internal scratch']
  %s0 = inlined_call_operand.vmem [shape: bf16[384,896], index: 0, kind: input, shape index: {}]
  %s1 = inlined_call_operand.vmem [shape: bf16[896,64], index: 1, kind: input, shape index: {}]
  %s2 = inlined_call_operand.vmem [shape: f32[1,64], index: 2, kind: input, shape index: {}]
  %s3 = inlined_call_operand.vmem [shape: bf16[64,64], index: 3, kind: input, shape index: {}]
  %s4 = inlined_call_operand.vmem [shape: f32[1,64], index: 4, kind: input, shape index: {}]
  %s5 = inlined_call_operand.vmem [shape: bf16[64,64], index: 5, kind: input, shape index: {}]
  %s6 = inlined_call_operand.vmem [shape: f32[1,64], index: 6, kind: input, shape index: {}]
  %s7 = inlined_call_operand.vmem [shape: bf16[64,128], index: 7, kind: input, shape index: {}]
  %s8 = inlined_call_operand.vmem [shape: f32[1,128], index: 8, kind: input, shape index: {}]
  %s9 = inlined_call_operand.vmem [shape: f32[384,128], index: 9, kind: output, shape index: {}]
  %s10 = sld [smem:[#allocation0]]
  $region69: #{net_forward.1} parent=0
    _
  %s12 = ssub.s32 1, %s10
  %s13 = scalar_select 0, %s12, %s10
  loop: start=0, step=1, limit=5
  $region2: #{net_forward.1} parent=0 // loop_pre_header
    _
  $region3: #{net_forward.1} parent=0 // loop_header
    %s15 = sphi 0, %s19
    %p16 = scmp.ge.s32.totalorder %s15, 5
    %s25 = sphi 0, %s27
    %s28 = sphi 0, %s25
    %s29 = sphi 0, %s28
    %s45 = sphi 0, %s29
    %s49 = sphi 0, %s49
    %s51 = sphi 0, %s49
    %s52 = sphi 0, %s51
    %s66 = sphi 0, %s52
    %s70 = sphi 0, %s70
    %s72 = sphi 0, %s70
    %s73 = sphi 0, %s72
    %s87 = sphi 0, %s73
    %s91 = sphi 0, %s91
    %s93 = sphi 0, %s91
    %s94 = sphi 0, %s93
    %s108 = sphi 0, %s94
    %s112 = sphi 0, %s112
    %s114 = sphi 0, %s112
    %s115 = sphi 0, %s114
    %s129 = sphi 0, %s115
    %s133 = sphi 0, %s133
    %s135 = sphi 0, %s133
    %s136 = sphi 0, %s135
    %s150 = sphi 0, %s136
    %s154 = sphi 0, %s154
    %s156 = sphi 0, %s154
    %s157 = sphi 0, %s156
    %s171 = sphi 0, %s157
    %s175 = sphi 0, %s175
    %s177 = sphi 0, %s175
    %s178 = sphi 0, %s177
    %s192 = sphi 0, %s178
    %s196 = sphi 0, %s196
    %s198 = sphi 0, %s196
    %s199 = sphi 0, %s198
    %s213 = sphi 0, %s199
    %s219 = sphi 0, %s221
    %s222 = sphi 0, %s219
    %s223 = sphi 0, %s222
    %s239 = sphi 0, %s223
  $region4: #{net_forward.1} parent=0 // loop_header_branch
    %18 = sbr.rel (%p16) target = $region8
  $region5: #{net_forward.1} parent=0 // loop_body
    %s20 = ssub.s32 %s15, 1
    %s21 = ssub.s32 %s15, 2
    %s22 = sadd.s32 %s15, 1
    %s23 = ssub.s32 %s15, %s22
    %p24 = scmp.eq.s32.totalorder %s23, 0
    %s26 = sadd.s32 %s25, 1
    %s27 = scalar_select %p24, %s25, %s26
    %p30 = pneg %p24
    %p31 = scmp.eq.s32.totalorder %s15, 2
    %p32 = por %p30, %p31
    %p33 = scmp.ne.s32.totalorder %s25, %s28
    %p34 = scmp.eq.s32.totalorder %s15, 0
    %p35 = por %p33, %p34
    %p36 = scmp.ne.s32.totalorder %s25, %s28
    %p37 = scmp.eq.s32.totalorder %s20, 2
    %p38 = por %p36, %p37
    %p39 = scmp.ne.s32.totalorder %s28, %s29
    %p40 = scmp.eq.s32.totalorder %s20, 0
    %p41 = por %p39, %p40
    %p42 = scmp.ne.s32.totalorder %s28, %s29
    %p43 = scmp.eq.s32.totalorder %s21, 2
    %p44 = por %p42, %p43
    %p46 = scmp.ne.s32.totalorder %s29, %s45
    %p47 = scmp.eq.s32.totalorder %s21, 0
    %p48 = por %p46, %p47
    %s50 = sadd.s32 %s49, 1
    %p53 = scmp.eq.s32.totalorder %s15, 2
    %p54 = scmp.ne.s32.totalorder %s49, %s51
    %p55 = scmp.eq.s32.totalorder %s15, 0
    %p56 = por %p54, %p55
    %p57 = scmp.ne.s32.totalorder %s49, %s51
    %p58 = scmp.eq.s32.totalorder %s20, 2
    %p59 = por %p57, %p58
    %p60 = scmp.ne.s32.totalorder %s51, %s52
    %p61 = scmp.eq.s32.totalorder %s20, 0
    %p62 = por %p60, %p61
    %p63 = scmp.ne.s32.totalorder %s51, %s52
    %p64 = scmp.eq.s32.totalorder %s21, 2
    %p65 = por %p63, %p64
    %p67 = scmp.ne.s32.totalorder %s52, %s66
    %p68 = scmp.eq.s32.totalorder %s21, 0
    %p69 = por %p67, %p68
    %s71 = sadd.s32 %s70, 1
    %p74 = scmp.eq.s32.totalorder %s15, 2
    %p75 = scmp.ne.s32.totalorder %s70, %s72
    %p76 = scmp.eq.s32.totalorder %s15, 0
    %p77 = por %p75, %p76
    %p78 = scmp.ne.s32.totalorder %s70, %s72
    %p79 = scmp.eq.s32.totalorder %s20, 2
    %p80 = por %p78, %p79
    %p81 = scmp.ne.s32.totalorder %s72, %s73
    %p82 = scmp.eq.s32.totalorder %s20, 0
    %p83 = por %p81, %p82
    %p84 = scmp.ne.s32.totalorder %s72, %s73
    %p85 = scmp.eq.s32.totalorder %s21, 2
    %p86 = por %p84, %p85
    %p88 = scmp.ne.s32.totalorder %s73, %s87
    %p89 = scmp.eq.s32.totalorder %s21, 0
    %p90 = por %p88, %p89
    %s92 = sadd.s32 %s91, 1
    %p95 = scmp.eq.s32.totalorder %s15, 2
    %p96 = scmp.ne.s32.totalorder %s91, %s93
    %p97 = scmp.eq.s32.totalorder %s15, 0
    %p98 = por %p96, %p97
    %p99 = scmp.ne.s32.totalorder %s91, %s93
    %p100 = scmp.eq.s32.totalorder %s20, 2
    %p101 = por %p99, %p100
    %p102 = scmp.ne.s32.totalorder %s93, %s94
    %p103 = scmp.eq.s32.totalorder %s20, 0
    %p104 = por %p102, %p103
    %p105 = scmp.ne.s32.totalorder %s93, %s94
    %p106 = scmp.eq.s32.totalorder %s21, 2
    %p107 = por %p105, %p106
    %p109 = scmp.ne.s32.totalorder %s94, %s108
    %p110 = scmp.eq.s32.totalorder %s21, 0
    %p111 = por %p109, %p110
    %s113 = sadd.s32 %s112, 1
    %p116 = scmp.eq.s32.totalorder %s15, 2
    %p117 = scmp.ne.s32.totalorder %s112, %s114
    %p118 = scmp.eq.s32.totalorder %s15, 0
    %p119 = por %p117, %p118
    %p120 = scmp.ne.s32.totalorder %s112, %s114
    %p121 = scmp.eq.s32.totalorder %s20, 2
    %p122 = por %p120, %p121
    %p123 = scmp.ne.s32.totalorder %s114, %s115
    %p124 = scmp.eq.s32.totalorder %s20, 0
    %p125 = por %p123, %p124
    %p126 = scmp.ne.s32.totalorder %s114, %s115
    %p127 = scmp.eq.s32.totalorder %s21, 2
    %p128 = por %p126, %p127
    %p130 = scmp.ne.s32.totalorder %s115, %s129
    %p131 = scmp.eq.s32.totalorder %s21, 0
    %p132 = por %p130, %p131
    %s134 = sadd.s32 %s133, 1
    %p137 = scmp.eq.s32.totalorder %s15, 2
    %p138 = scmp.ne.s32.totalorder %s133, %s135
    %p139 = scmp.eq.s32.totalorder %s15, 0
    %p140 = por %p138, %p139
    %p141 = scmp.ne.s32.totalorder %s133, %s135
    %p142 = scmp.eq.s32.totalorder %s20, 2
    %p143 = por %p141, %p142
    %p144 = scmp.ne.s32.totalorder %s135, %s136
    %p145 = scmp.eq.s32.totalorder %s20, 0
    %p146 = por %p144, %p145
    %p147 = scmp.ne.s32.totalorder %s135, %s136
    %p148 = scmp.eq.s32.totalorder %s21, 2
    %p149 = por %p147, %p148
    %p151 = scmp.ne.s32.totalorder %s136, %s150
    %p152 = scmp.eq.s32.totalorder %s21, 0
    %p153 = por %p151, %p152
    %s155 = sadd.s32 %s154, 1
    %p158 = scmp.eq.s32.totalorder %s15, 2
    %p159 = scmp.ne.s32.totalorder %s154, %s156
    %p160 = scmp.eq.s32.totalorder %s15, 0
    %p161 = por %p159, %p160
    %p162 = scmp.ne.s32.totalorder %s154, %s156
    %p163 = scmp.eq.s32.totalorder %s20, 2
    %p164 = por %p162, %p163
    %p165 = scmp.ne.s32.totalorder %s156, %s157
    %p166 = scmp.eq.s32.totalorder %s20, 0
    %p167 = por %p165, %p166
    %p168 = scmp.ne.s32.totalorder %s156, %s157
    %p169 = scmp.eq.s32.totalorder %s21, 2
    %p170 = por %p168, %p169
    %p172 = scmp.ne.s32.totalorder %s157, %s171
    %p173 = scmp.eq.s32.totalorder %s21, 0
    %p174 = por %p172, %p173
    %s176 = sadd.s32 %s175, 1
    %p179 = scmp.eq.s32.totalorder %s15, 2
    %p180 = scmp.ne.s32.totalorder %s175, %s177
    %p181 = scmp.eq.s32.totalorder %s15, 0
    %p182 = por %p180, %p181
    %p183 = scmp.ne.s32.totalorder %s175, %s177
    %p184 = scmp.eq.s32.totalorder %s20, 2
    %p185 = por %p183, %p184
    %p186 = scmp.ne.s32.totalorder %s177, %s178
    %p187 = scmp.eq.s32.totalorder %s20, 0
    %p188 = por %p186, %p187
    %p189 = scmp.ne.s32.totalorder %s177, %s178
    %p190 = scmp.eq.s32.totalorder %s21, 2
    %p191 = por %p189, %p190
    %p193 = scmp.ne.s32.totalorder %s178, %s192
    %p194 = scmp.eq.s32.totalorder %s21, 0
    %p195 = por %p193, %p194
    %s197 = sadd.s32 %s196, 1
    %p200 = scmp.eq.s32.totalorder %s15, 2
    %p201 = scmp.ne.s32.totalorder %s196, %s198
    %p202 = scmp.eq.s32.totalorder %s15, 0
    %p203 = por %p201, %p202
    %p204 = scmp.ne.s32.totalorder %s196, %s198
    %p205 = scmp.eq.s32.totalorder %s20, 2
    %p206 = por %p204, %p205
    %p207 = scmp.ne.s32.totalorder %s198, %s199
    %p208 = scmp.eq.s32.totalorder %s20, 0
    %p209 = por %p207, %p208
    %p210 = scmp.ne.s32.totalorder %s198, %s199
    %p211 = scmp.eq.s32.totalorder %s21, 2
    %p212 = por %p210, %p211
    %p214 = scmp.ne.s32.totalorder %s199, %s213
    %p215 = scmp.eq.s32.totalorder %s21, 0
    %p216 = por %p214, %p215
    %s217 = ssub.s32 %s15, %s22
    %p218 = scmp.eq.s32.totalorder %s217, 0
    %s220 = sadd.s32 %s219, 1
    %s221 = scalar_select %p218, %s219, %s220
    %p224 = pneg %p218
    %p225 = scmp.eq.s32.totalorder %s15, 2
    %p226 = por %p224, %p225
    %p227 = scmp.ne.s32.totalorder %s219, %s222
    %p228 = scmp.eq.s32.totalorder %s15, 0
    %p229 = por %p227, %p228
    %p230 = scmp.ne.s32.totalorder %s219, %s222
    %p231 = scmp.eq.s32.totalorder %s20, 2
    %p232 = por %p230, %p231
    %p233 = scmp.ne.s32.totalorder %s222, %s223
    %p234 = scmp.eq.s32.totalorder %s20, 0
    %p235 = por %p233, %p234
    %p236 = scmp.ne.s32.totalorder %s222, %s223
    %p237 = scmp.eq.s32.totalorder %s21, 2
    %p238 = por %p236, %p237
    %p240 = scmp.ne.s32.totalorder %s223, %s239
    %p241 = scmp.eq.s32.totalorder %s21, 0
    %p242 = por %p240, %p241
    %p243 = scmp.le.s32.totalorder 1, %s15
    %p244 = scmp.lt.s32.totalorder %s15, 4
    %p245 = pnand %p243, %p244
    %p246 = pneg %p245
    // Predicated region
    $region9: #{net_forward.1} parent=5 // pred_check
      _
    $region10: #{net_forward.1} parent=5 // pred_check_branch
      %248 = sbr.rel (%p245) target = $region12
    $region11: #{net_forward.1} parent=5 // pred_region
      %s249 = ssub.s32 %s15, 1
      // Predicated region
      $region13: #{net_forward.1} parent=11 // pred_check
        %p250 = pneg %p62
      $region14: #{net_forward.1} parent=11 // pred_check_branch
        %252 = sbr.rel (%p250) target = $region16
      $region15: #{net_forward.1} parent=11 // pred_region
        _
      $region16: #{net_forward.1} parent=11 // pred_fallthru
        _
      // Predicated region
      $region17: #{net_forward.1} parent=11 // pred_check
        %p253 = pneg %p83
      $region18: #{net_forward.1} parent=11 // pred_check_branch
        %255 = sbr.rel (%p253) target = $region20
      $region19: #{net_forward.1} parent=11 // pred_region
        _
      $region20: #{net_forward.1} parent=11 // pred_fallthru
        _
      // Predicated region
      $region21: #{net_forward.1} parent=11 // pred_check
        %p256 = pneg %p104
      $region22: #{net_forward.1} parent=11 // pred_check_branch
        %258 = sbr.rel (%p256) target = $region24
      $region23: #{net_forward.1} parent=11 // pred_region
        _
      $region24: #{net_forward.1} parent=11 // pred_fallthru
        _
      // Predicated region
      $region25: #{net_forward.1} parent=11 // pred_check
        %p259 = pneg %p125
      $region26: #{net_forward.1} parent=11 // pred_check_branch
        %261 = sbr.rel (%p259) target = $region28
      $region27: #{net_forward.1} parent=11 // pred_region
        _
      $region28: #{net_forward.1} parent=11 // pred_fallthru
        _
      // Predicated region
      $region29: #{net_forward.1} parent=11 // pred_check
        %p262 = pneg %p146
      $region30: #{net_forward.1} parent=11 // pred_check_branch
        %264 = sbr.rel (%p262) target = $region32
      $region31: #{net_forward.1} parent=11 // pred_region
        _
      $region32: #{net_forward.1} parent=11 // pred_fallthru
        _
      // Predicated region
      $region33: #{net_forward.1} parent=11 // pred_check
        %p265 = pneg %p167
      $region34: #{net_forward.1} parent=11 // pred_check_branch
        %267 = sbr.rel (%p265) target = $region36
      $region35: #{net_forward.1} parent=11 // pred_region
        _
      $region36: #{net_forward.1} parent=11 // pred_fallthru
        _
      // Predicated region
      $region37: #{net_forward.1} parent=11 // pred_check
        %p268 = pneg %p188
      $region38: #{net_forward.1} parent=11 // pred_check_branch
        %270 = sbr.rel (%p268) target = $region40
      $region39: #{net_forward.1} parent=11 // pred_region
        _
      $region40: #{net_forward.1} parent=11 // pred_fallthru
        _
      // Predicated region
      $region41: #{net_forward.1} parent=11 // pred_check
        %p271 = pneg %p209
      $region42: #{net_forward.1} parent=11 // pred_check_branch
        %273 = sbr.rel (%p271) target = $region44
      $region43: #{net_forward.1} parent=11 // pred_region
        _
      $region44: #{net_forward.1} parent=11 // pred_fallthru
        _
    $region12: #{net_forward.1} parent=5 // pred_fallthru
      _
    %p274 = scmp.lt.s32.totalorder %s15, 3
    // Predicated region
    $region45: #{net_forward.1} parent=5 // pred_check
      %p275 = pneg %p274
    $region46: #{net_forward.1} parent=5 // pred_check_branch
      %277 = sbr.rel (%p275) target = $region48
    $region47: #{net_forward.1} parent=5 // pred_region
      // Predicated region
      $region49: #{net_forward.1} parent=47 // pred_check
        %p278 = pneg %p35
      $region50: #{net_forward.1} parent=47 // pred_check_branch
        %280 = sbr.rel (%p278) target = $region52
      $region51: #{net_forward.1} parent=47 // pred_region
        %s281 = smul.u32 16, %s15
        %p282 = scmp.lt.s32.totalorder %s281, 47
        %s283 = scalar_select %p282, %s281, 47
        %s284 = smul.addr %s283, 7
        %s285 = smul.addr %s284, 4
        %s286 = scalar_lea.vmem %s0, %s285
        %s287 = smul.u32 16, %s15
      $region52: #{net_forward.1} parent=47 // pred_fallthru
        _
    $region48: #{net_forward.1} parent=5 // pred_fallthru
      _
    %p288 = scmp.le.s32.totalorder 1, %s15
    %p289 = scmp.lt.s32.totalorder %s15, 4
    %p290 = pnand %p288, %p289
    %p291 = pneg %p290
    // Predicated region
    $region53: #{net_forward.1} parent=5 // pred_check
      _
    $region54: #{net_forward.1} parent=5 // pred_check_branch
      %293 = sbr.rel (%p290) target = $region56
    $region55: #{net_forward.1} parent=5 // pred_region
      %s294 = ssub.s32 %s15, 1
      %s295 = smul.u32 16, %s20
      %p296 = scmp.lt.s32.totalorder %s295, 47
      %s297 = scalar_select %p296, %s295, 47
      %s298 = smul.addr %s297, 7
      %s299 = smul.addr %s298, 4
      %s300 = scalar_lea.vmem %s0, %s299
      %p301 = pneg %p41
      %p302 = pneg %p38
      %p303 = pneg %p62
      %p304 = pneg %p59
      %p305 = pneg %p83
      %p306 = pneg %p80
      %p307 = pneg %p104
      %p308 = pneg %p101
      %p309 = pneg %p125
      %p310 = pneg %p122
      %p311 = pneg %p146
      %p312 = pneg %p143
      %p313 = pneg %p167
      %p314 = pneg %p164
      %p315 = pneg %p188
      %p316 = pneg %p185
      %p317 = pneg %p209
      %p318 = pneg %p206
      %p319 = pneg %p235
      %p320 = pneg %p232
      %s321 = smul.u32 16, %s20
      %p322 = scmp.lt.s32.totalorder %s321, 47
      %s323 = scalar_select %p322, %s321, 47
      %s324 = smul.addr %s323, 8
      %s325 = scalar_lea.vmem %s9, %s324
      %s326 = smul.u32 16, %s20
      %p327 = scmp.lt.s32.totalorder %s326, 47
      %s328 = scalar_select %p327, %s326, 47
      %s329 = smul.addr %s328, 7
      %s330 = smul.addr %s329, 4
      %s331 = scalar_lea.vmem %s0, %s330
      %s332 = smul.u32 16, %s20
      %s333 = smul.u32 16, %s20
      %p334 = scmp.lt.s32.totalorder %s333, 47
      %s335 = scalar_select %p334, %s333, 47
      %s336 = smul.addr %s335, 8
      %s337 = scalar_lea.vmem %s9, %s336
      %s338 = smul.u32 16, %s20
      %v340 = vld [vmem:[%s331] sm:$0xff]
      %v341 = vld [vmem:[%s331 + $0x8] sm:$0xff]
      %v342 = vld [vmem:[%s331 + $0x10] sm:$0xff]
      %v343 = vld [vmem:[%s331 + $0x18] sm:$0xf]
      %v344 = vld [vmem:[%s331 + $0x1c] sm:$0xff]
      %v345 = vld [vmem:[%s331 + $0x24] sm:$0xff]
      %v346 = vld [vmem:[%s331 + $0x2c] sm:$0xff]
      %v347 = vld [vmem:[%s331 + $0x34] sm:$0xf]
      %v348 = vld [vmem:[%s331 + $0x38] sm:$0xff]
      %v349 = vld [vmem:[%s331 + $0x40] sm:$0xff]
      %v350 = vld [vmem:[%s331 + $0x48] sm:$0xff]
      %v351 = vld [vmem:[%s331 + $0x50] sm:$0xf]
      %v352 = vld [vmem:[%s331 + $0x54] sm:$0xff]
      %v353 = vld [vmem:[%s331 + $0x5c] sm:$0xff]
      %v354 = vld [vmem:[%s331 + $0x64] sm:$0xff]
      %v355 = vld [vmem:[%s331 + $0x6c] sm:$0xf]
      %v356 = vld [vmem:[%s331 + $0x70] sm:$0xff]
      %v357 = vld [vmem:[%s331 + $0x78] sm:$0xff]
      %v358 = vld [vmem:[%s331 + $0x80] sm:$0xff]
      %v359 = vld [vmem:[%s331 + $0x88] sm:$0xf]
      %v360 = vld [vmem:[%s331 + $0x8c] sm:$0xff]
      %v361 = vld [vmem:[%s331 + $0x94] sm:$0xff]
      %v362 = vld [vmem:[%s331 + $0x9c] sm:$0xff]
      %v363 = vld [vmem:[%s331 + $0xa4] sm:$0xf]
      %v364 = vld [vmem:[%s331 + $0xa8] sm:$0xff]
      %v365 = vld [vmem:[%s331 + $0xb0] sm:$0xff]
      %v366 = vld [vmem:[%s331 + $0xb8] sm:$0xff]
      %v367 = vld [vmem:[%s331 + $0xc0] sm:$0xf]
      %v368 = vld [vmem:[%s331 + $0xc4] sm:$0xff]
      %v369 = vld [vmem:[%s331 + $0xcc] sm:$0xff]
      %v370 = vld [vmem:[%s331 + $0xd4] sm:$0xff]
      %v371 = vld [vmem:[%s331 + $0xdc] sm:$0xf]
      %v372 = vld [vmem:[%s331 + $0xe0] sm:$0xff]
      %v373 = vld [vmem:[%s331 + $0xe8] sm:$0xff]
      %v374 = vld [vmem:[%s331 + $0xf0] sm:$0xff]
      %v375 = vld [vmem:[%s331 + $0xf8] sm:$0xf]
      %v376 = vld [vmem:[%s331 + $0xfc] sm:$0xff]
      %v377 = vld [vmem:[%s331 + $0x104] sm:$0xff]
      %v378 = vld [vmem:[%s331 + $0x10c] sm:$0xff]
      %v379 = vld [vmem:[%s331 + $0x114] sm:$0xf]
      %v380 = vld [vmem:[%s331 + $0x118] sm:$0xff]
      %v381 = vld [vmem:[%s331 + $0x120] sm:$0xff]
      %v382 = vld [vmem:[%s331 + $0x128] sm:$0xff]
      %v383 = vld [vmem:[%s331 + $0x130] sm:$0xf]
      %v384 = vld [vmem:[%s331 + $0x134] sm:$0xff]
      %v385 = vld [vmem:[%s331 + $0x13c] sm:$0xff]
      %v386 = vld [vmem:[%s331 + $0x144] sm:$0xff]
      %v387 = vld [vmem:[%s331 + $0x14c] sm:$0xf]
      %v388 = vld [vmem:[%s331 + $0x150] sm:$0xff]
      %v389 = vld [vmem:[%s331 + $0x158] sm:$0xff]
      %v390 = vld [vmem:[%s331 + $0x160] sm:$0xff]
      %v391 = vld [vmem:[%s331 + $0x168] sm:$0xf]
      %v392 = vld [vmem:[%s331 + $0x16c] sm:$0xff]
      %v393 = vld [vmem:[%s331 + $0x174] sm:$0xff]
      %v394 = vld [vmem:[%s331 + $0x17c] sm:$0xff]
      %v395 = vld [vmem:[%s331 + $0x184] sm:$0xf]
      %v396 = vld [vmem:[%s331 + $0x188] sm:$0xff]
      %v397 = vld [vmem:[%s331 + $0x190] sm:$0xff]
      %v398 = vld [vmem:[%s331 + $0x198] sm:$0xff]
      %v399 = vld [vmem:[%s331 + $0x1a0] sm:$0xf]
      %v400 = vld [vmem:[%s331 + $0x1a4] sm:$0xff]
      %v401 = vld [vmem:[%s331 + $0x1ac] sm:$0xff]
      %v402 = vld [vmem:[%s331 + $0x1b4] sm:$0xff]
      %v403 = vld [vmem:[%s331 + $0x1bc] sm:$0xf]
      %v404 = vld [vmem:[%s1] sm:$0xf]
      %v405 = vld [vmem:[%s1 + $0x4] sm:$0xf]
      %v406 = vld [vmem:[%s1 + $0x8] sm:$0xf]
      %v407 = vld [vmem:[%s1 + $0xc] sm:$0xf]
      %v408 = vld [vmem:[%s1 + $0x10] sm:$0xf]
      %v409 = vld [vmem:[%s1 + $0x14] sm:$0xf]
      %v410 = vld [vmem:[%s1 + $0x18] sm:$0xf]
      %v411 = vld [vmem:[%s1 + $0x1c] sm:$0xf]
      %v412 = vld [vmem:[%s1 + $0x20] sm:$0xf]
      %v413 = vld [vmem:[%s1 + $0x24] sm:$0xf]
      %v414 = vld [vmem:[%s1 + $0x28] sm:$0xf]
      %v415 = vld [vmem:[%s1 + $0x2c] sm:$0xf]
      %v416 = vld [vmem:[%s1 + $0x30] sm:$0xf]
      %v417 = vld [vmem:[%s1 + $0x34] sm:$0xf]
      %v418 = vld [vmem:[%s1 + $0x38] sm:$0xf]
      %v419 = vld [vmem:[%s1 + $0x3c] sm:$0xf]
      %v420 = vld [vmem:[%s1 + $0x40] sm:$0xf]
      %v421 = vld [vmem:[%s1 + $0x44] sm:$0xf]
      %v422 = vld [vmem:[%s1 + $0x48] sm:$0xf]
      %v423 = vld [vmem:[%s1 + $0x4c] sm:$0xf]
      %v424 = vld [vmem:[%s1 + $0x50] sm:$0xf]
      %v425 = vld [vmem:[%s1 + $0x54] sm:$0xf]
      %v426 = vld [vmem:[%s1 + $0x58] sm:$0xf]
      %v427 = vld [vmem:[%s1 + $0x5c] sm:$0xf]
      %v428 = vld [vmem:[%s1 + $0x60] sm:$0xf]
      %v429 = vld [vmem:[%s1 + $0x64] sm:$0xf]
      %v430 = vld [vmem:[%s1 + $0x68] sm:$0xf]
      %v431 = vld [vmem:[%s1 + $0x6c] sm:$0xf]
      %v432 = vld [vmem:[%s1 + $0x70] sm:$0xf]
      %v433 = vld [vmem:[%s1 + $0x74] sm:$0xf]
      %v434 = vld [vmem:[%s1 + $0x78] sm:$0xf]
      %v435 = vld [vmem:[%s1 + $0x7c] sm:$0xf]
      %v436 = vld [vmem:[%s1 + $0x80] sm:$0xf]
      %v437 = vld [vmem:[%s1 + $0x84] sm:$0xf]
      %v438 = vld [vmem:[%s1 + $0x88] sm:$0xf]
      %v439 = vld [vmem:[%s1 + $0x8c] sm:$0xf]
      %v440 = vld [vmem:[%s1 + $0x90] sm:$0xf]
      %v441 = vld [vmem:[%s1 + $0x94] sm:$0xf]
      %v442 = vld [vmem:[%s1 + $0x98] sm:$0xf]
      %v443 = vld [vmem:[%s1 + $0x9c] sm:$0xf]
      %v444 = vld [vmem:[%s1 + $0xa0] sm:$0xf]
      %v445 = vld [vmem:[%s1 + $0xa4] sm:$0xf]
      %v446 = vld [vmem:[%s1 + $0xa8] sm:$0xf]
      %v447 = vld [vmem:[%s1 + $0xac] sm:$0xf]
      %v448 = vld [vmem:[%s1 + $0xb0] sm:$0xf]
      %v449 = vld [vmem:[%s1 + $0xb4] sm:$0xf]
      %v450 = vld [vmem:[%s1 + $0xb8] sm:$0xf]
      %v451 = vld [vmem:[%s1 + $0xbc] sm:$0xf]
      %v452 = vld [vmem:[%s1 + $0xc0] sm:$0xf]
      %v453 = vld [vmem:[%s1 + $0xc4] sm:$0xf]
      %v454 = vld [vmem:[%s1 + $0xc8] sm:$0xf]
      %v455 = vld [vmem:[%s1 + $0xcc] sm:$0xf]
      %v456 = vld [vmem:[%s1 + $0xd0] sm:$0xf]
      %v457 = vld [vmem:[%s1 + $0xd4] sm:$0xf]
      %v458 = vld [vmem:[%s1 + $0xd8] sm:$0xf]
      %v459 = vld [vmem:[%s1 + $0xdc] sm:$0xf]
      %v460 = vld [vmem:[%s1 + $0xe0] sm:$0xf]
      %v461 = vld [vmem:[%s1 + $0xe4] sm:$0xf]
      %v462 = vld [vmem:[%s1 + $0xe8] sm:$0xf]
      %v463 = vld [vmem:[%s1 + $0xec] sm:$0xf]
      %v464 = vld [vmem:[%s1 + $0xf0] sm:$0xf]
      %v465 = vld [vmem:[%s1 + $0xf4] sm:$0xf]
      %v466 = vld [vmem:[%s1 + $0xf8] sm:$0xf]
      %v467 = vld [vmem:[%s1 + $0xfc] sm:$0xf]
      %v468 = vld [vmem:[%s1 + $0x100] sm:$0xf]
      %v469 = vld [vmem:[%s1 + $0x104] sm:$0xf]
      %v470 = vld [vmem:[%s1 + $0x108] sm:$0xf]
      %v471 = vld [vmem:[%s1 + $0x10c] sm:$0xf]
      %v472 = vld [vmem:[%s1 + $0x110] sm:$0xf]
      %v473 = vld [vmem:[%s1 + $0x114] sm:$0xf]
      %v474 = vld [vmem:[%s1 + $0x118] sm:$0xf]
      %v475 = vld [vmem:[%s1 + $0x11c] sm:$0xf]
      %v476 = vld [vmem:[%s1 + $0x120] sm:$0xf]
      %v477 = vld [vmem:[%s1 + $0x124] sm:$0xf]
      %v478 = vld [vmem:[%s1 + $0x128] sm:$0xf]
      %v479 = vld [vmem:[%s1 + $0x12c] sm:$0xf]
      %v480 = vld [vmem:[%s1 + $0x130] sm:$0xf]
      %v481 = vld [vmem:[%s1 + $0x134] sm:$0xf]
      %v482 = vld [vmem:[%s1 + $0x138] sm:$0xf]
      %v483 = vld [vmem:[%s1 + $0x13c] sm:$0xf]
      %v484 = vld [vmem:[%s1 + $0x140] sm:$0xf]
      %v485 = vld [vmem:[%s1 + $0x144] sm:$0xf]
      %v486 = vld [vmem:[%s1 + $0x148] sm:$0xf]
      %v487 = vld [vmem:[%s1 + $0x14c] sm:$0xf]
      %v488 = vld [vmem:[%s1 + $0x150] sm:$0xf]
      %v489 = vld [vmem:[%s1 + $0x154] sm:$0xf]
      %v490 = vld [vmem:[%s1 + $0x158] sm:$0xf]
      %v491 = vld [vmem:[%s1 + $0x15c] sm:$0xf]
      %v492 = vld [vmem:[%s1 + $0x160] sm:$0xf]
      %v493 = vld [vmem:[%s1 + $0x164] sm:$0xf]
      %v494 = vld [vmem:[%s1 + $0x168] sm:$0xf]
      %v495 = vld [vmem:[%s1 + $0x16c] sm:$0xf]
      %v496 = vld [vmem:[%s1 + $0x170] sm:$0xf]
      %v497 = vld [vmem:[%s1 + $0x174] sm:$0xf]
      %v498 = vld [vmem:[%s1 + $0x178] sm:$0xf]
      %v499 = vld [vmem:[%s1 + $0x17c] sm:$0xf]
      %v500 = vld [vmem:[%s1 + $0x180] sm:$0xf]
      %v501 = vld [vmem:[%s1 + $0x184] sm:$0xf]
      %v502 = vld [vmem:[%s1 + $0x188] sm:$0xf]
      %v503 = vld [vmem:[%s1 + $0x18c] sm:$0xf]
      %v504 = vld [vmem:[%s1 + $0x190] sm:$0xf]
      %v505 = vld [vmem:[%s1 + $0x194] sm:$0xf]
      %v506 = vld [vmem:[%s1 + $0x198] sm:$0xf]
      %v507 = vld [vmem:[%s1 + $0x19c] sm:$0xf]
      %v508 = vld [vmem:[%s1 + $0x1a0] sm:$0xf]
      %v509 = vld [vmem:[%s1 + $0x1a4] sm:$0xf]
      %v510 = vld [vmem:[%s1 + $0x1a8] sm:$0xf]
      %v511 = vld [vmem:[%s1 + $0x1ac] sm:$0xf]
      %v512 = vld [vmem:[%s1 + $0x1b0] sm:$0xf]
      %v513 = vld [vmem:[%s1 + $0x1b4] sm:$0xf]
      %v514 = vld [vmem:[%s1 + $0x1b8] sm:$0xf]
      %v515 = vld [vmem:[%s1 + $0x1bc] sm:$0xf]
      %v516 = vld [vmem:[%s2] sm:$0x1]
      %v518 = vlaneseq
      %v519 = vshrl.u32 %v518, 7
      %v520 = vsub.s32 0, %v519
      %v521 = vrot.slane %v516, %v520
      %v587 = vunpack.c.l.b16 %v340
      %v588 = vunpack.c.h.b16 %v340
      %v589 = vunpack.c.l.b16 %v341
      %v590 = vunpack.c.h.b16 %v341
      %v591 = vunpack.c.l.b16 %v342
      %v592 = vunpack.c.h.b16 %v342
      %v593 = vunpack.c.l.b16 %v343
      %v594 = vunpack.c.l.b16 %v344
      %v595 = vunpack.c.h.b16 %v344
      %v596 = vunpack.c.l.b16 %v345
      %v597 = vunpack.c.h.b16 %v345
      %v598 = vunpack.c.l.b16 %v346
      %v599 = vunpack.c.h.b16 %v346
      %v600 = vunpack.c.l.b16 %v347
      %v601 = vunpack.c.l.b16 %v348
      %v602 = vunpack.c.h.b16 %v348
      %v603 = vunpack.c.l.b16 %v349
      %v604 = vunpack.c.h.b16 %v349
      %v605 = vunpack.c.l.b16 %v350
      %v606 = vunpack.c.h.b16 %v350
      %v607 = vunpack.c.l.b16 %v351
      %v608 = vunpack.c.l.b16 %v352
      %v609 = vunpack.c.h.b16 %v352
      %v610 = vunpack.c.l.b16 %v353
      %v611 = vunpack.c.h.b16 %v353
      %v612 = vunpack.c.l.b16 %v354
      %v613 = vunpack.c.h.b16 %v354
      %v614 = vunpack.c.l.b16 %v355
      %v615 = vunpack.c.l.b16 %v356
      %v616 = vunpack.c.h.b16 %v356
      %v617 = vunpack.c.l.b16 %v357
      %v618 = vunpack.c.h.b16 %v357
      %v619 = vunpack.c.l.b16 %v358
      %v620 = vunpack.c.h.b16 %v358
      %v621 = vunpack.c.l.b16 %v359
      %v622 = vunpack.c.l.b16 %v360
      %v623 = vunpack.c.h.b16 %v360
      %v624 = vunpack.c.l.b16 %v361
      %v625 = vunpack.c.h.b16 %v361
      %v626 = vunpack.c.l.b16 %v362
      %v627 = vunpack.c.h.b16 %v362
      %v628 = vunpack.c.l.b16 %v363
      %v629 = vunpack.c.l.b16 %v364
      %v630 = vunpack.c.h.b16 %v364
      %v631 = vunpack.c.l.b16 %v365
      %v632 = vunpack.c.h.b16 %v365
      %v633 = vunpack.c.l.b16 %v366
      %v634 = vunpack.c.h.b16 %v366
      %v635 = vunpack.c.l.b16 %v367
      %v636 = vunpack.c.l.b16 %v368
      %v637 = vunpack.c.h.b16 %v368
      %v638 = vunpack.c.l.b16 %v369
      %v639 = vunpack.c.h.b16 %v369
      %v640 = vunpack.c.l.b16 %v370
      %v641 = vunpack.c.h.b16 %v370
      %v642 = vunpack.c.l.b16 %v371
      %v643 = vunpack.c.l.b16 %v372
      %v644 = vunpack.c.h.b16 %v372
      %v645 = vunpack.c.l.b16 %v373
      %v646 = vunpack.c.h.b16 %v373
      %v647 = vunpack.c.l.b16 %v374
      %v648 = vunpack.c.h.b16 %v374
      %v649 = vunpack.c.l.b16 %v375
      %v650 = vunpack.c.l.b16 %v376
      %v651 = vunpack.c.h.b16 %v376
      %v652 = vunpack.c.l.b16 %v377
      %v653 = vunpack.c.h.b16 %v377
      %v654 = vunpack.c.l.b16 %v378
      %v655 = vunpack.c.h.b16 %v378
      %v656 = vunpack.c.l.b16 %v379
      %v657 = vunpack.c.l.b16 %v380
      %v658 = vunpack.c.h.b16 %v380
      %v659 = vunpack.c.l.b16 %v381
      %v660 = vunpack.c.h.b16 %v381
      %v661 = vunpack.c.l.b16 %v382
      %v662 = vunpack.c.h.b16 %v382
      %v663 = vunpack.c.l.b16 %v383
      %v664 = vunpack.c.l.b16 %v384
      %v665 = vunpack.c.h.b16 %v384
      %v666 = vunpack.c.l.b16 %v385
      %v667 = vunpack.c.h.b16 %v385
      %v668 = vunpack.c.l.b16 %v386
      %v669 = vunpack.c.h.b16 %v386
      %v670 = vunpack.c.l.b16 %v387
      %v671 = vunpack.c.l.b16 %v388
      %v672 = vunpack.c.h.b16 %v388
      %v673 = vunpack.c.l.b16 %v389
      %v674 = vunpack.c.h.b16 %v389
      %v675 = vunpack.c.l.b16 %v390
      %v676 = vunpack.c.h.b16 %v390
      %v677 = vunpack.c.l.b16 %v391
      %v678 = vunpack.c.l.b16 %v392
      %v679 = vunpack.c.h.b16 %v392
      %v680 = vunpack.c.l.b16 %v393
      %v681 = vunpack.c.h.b16 %v393
      %v682 = vunpack.c.l.b16 %v394
      %v683 = vunpack.c.h.b16 %v394
      %v684 = vunpack.c.l.b16 %v395
      %v685 = vunpack.c.l.b16 %v396
      %v686 = vunpack.c.h.b16 %v396
      %v687 = vunpack.c.l.b16 %v397
      %v688 = vunpack.c.h.b16 %v397
      %v689 = vunpack.c.l.b16 %v398
      %v690 = vunpack.c.h.b16 %v398
      %v691 = vunpack.c.l.b16 %v399
      %v692 = vunpack.c.l.b16 %v400
      %v693 = vunpack.c.h.b16 %v400
      %v694 = vunpack.c.l.b16 %v401
      %v695 = vunpack.c.h.b16 %v401
      %v696 = vunpack.c.l.b16 %v402
      %v697 = vunpack.c.h.b16 %v402
      %v698 = vunpack.c.l.b16 %v403
      %v699 = vpack.c.b16 %v594, %v587
      %v700 = vpack.c.b16 %v595, %v588
      %v701 = vpack.c.b16 %v596, %v589
      %v702 = vpack.c.b16 %v597, %v590
      %v703 = vpack.c.b16 %v598, %v591
      %v704 = vpack.c.b16 %v599, %v592
      %v705 = vpack.c.b16 %v600, %v593
      %v706 = vpack.c.b16 %v608, %v601
      %v707 = vpack.c.b16 %v609, %v602
      %v708 = vpack.c.b16 %v610, %v603
      %v709 = vpack.c.b16 %v611, %v604
      %v710 = vpack.c.b16 %v612, %v605
      %v711 = vpack.c.b16 %v613, %v606
      %v712 = vpack.c.b16 %v614, %v607
      %v713 = vpack.c.b16 %v622, %v615
      %v714 = vpack.c.b16 %v623, %v616
      %v715 = vpack.c.b16 %v624, %v617
      %v716 = vpack.c.b16 %v625, %v618
      %v717 = vpack.c.b16 %v626, %v619
      %v718 = vpack.c.b16 %v627, %v620
      %v719 = vpack.c.b16 %v628, %v621
      %v720 = vpack.c.b16 %v636, %v629
      %v721 = vpack.c.b16 %v637, %v630
      %v722 = vpack.c.b16 %v638, %v631
      %v723 = vpack.c.b16 %v639, %v632
      %v724 = vpack.c.b16 %v640, %v633
      %v725 = vpack.c.b16 %v641, %v634
      %v726 = vpack.c.b16 %v642, %v635
      %v727 = vpack.c.b16 %v650, %v643
      %v728 = vpack.c.b16 %v651, %v644
      %v729 = vpack.c.b16 %v652, %v645
      %v730 = vpack.c.b16 %v653, %v646
      %v731 = vpack.c.b16 %v654, %v647
      %v732 = vpack.c.b16 %v655, %v648
      %v733 = vpack.c.b16 %v656, %v649
      %v734 = vpack.c.b16 %v664, %v657
      %v735 = vpack.c.b16 %v665, %v658
      %v736 = vpack.c.b16 %v666, %v659
      %v737 = vpack.c.b16 %v667, %v660
      %v738 = vpack.c.b16 %v668, %v661
      %v739 = vpack.c.b16 %v669, %v662
      %v740 = vpack.c.b16 %v670, %v663
      %v741 = vpack.c.b16 %v678, %v671
      %v742 = vpack.c.b16 %v679, %v672
      %v743 = vpack.c.b16 %v680, %v673
      %v744 = vpack.c.b16 %v681, %v674
      %v745 = vpack.c.b16 %v682, %v675
      %v746 = vpack.c.b16 %v683, %v676
      %v747 = vpack.c.b16 %v684, %v677
      %v748 = vpack.c.b16 %v692, %v685
      %v749 = vpack.c.b16 %v693, %v686
      %v750 = vpack.c.b16 %v694, %v687
      %v751 = vpack.c.b16 %v695, %v688
      %v752 = vpack.c.b16 %v696, %v689
      %v753 = vpack.c.b16 %v697, %v690
      %v754 = vpack.c.b16 %v698, %v691
      %v923 = vunpack.c.l.b16 %v404
      %v924 = vunpack.c.l.b16 %v405
      %v925 = vunpack.c.l.b16 %v406
      %v926 = vunpack.c.l.b16 %v407
      %v927 = vunpack.c.l.b16 %v408
      %v928 = vunpack.c.l.b16 %v409
      %v929 = vunpack.c.l.b16 %v410
      %v930 = vunpack.c.l.b16 %v411
      %v931 = vunpack.c.l.b16 %v412
      %v932 = vunpack.c.l.b16 %v413
      %v933 = vunpack.c.l.b16 %v414
      %v934 = vunpack.c.l.b16 %v415
      %v935 = vunpack.c.l.b16 %v416
      %v936 = vunpack.c.l.b16 %v417
      %v937 = vunpack.c.l.b16 %v418
      %v938 = vunpack.c.l.b16 %v419
      %v939 = vunpack.c.l.b16 %v420
      %v940 = vunpack.c.l.b16 %v421
      %v941 = vunpack.c.l.b16 %v422
      %v942 = vunpack.c.l.b16 %v423
      %v943 = vunpack.c.l.b16 %v424
      %v944 = vunpack.c.l.b16 %v425
      %v945 = vunpack.c.l.b16 %v426
      %v946 = vunpack.c.l.b16 %v427
      %v947 = vunpack.c.l.b16 %v428
      %v948 = vunpack.c.l.b16 %v429
      %v949 = vunpack.c.l.b16 %v430
      %v950 = vunpack.c.l.b16 %v431
      %v951 = vunpack.c.l.b16 %v432
      %v952 = vunpack.c.l.b16 %v433
      %v953 = vunpack.c.l.b16 %v434
      %v954 = vunpack.c.l.b16 %v435
      %v955 = vunpack.c.l.b16 %v436
      %v956 = vunpack.c.l.b16 %v437
      %v957 = vunpack.c.l.b16 %v438
      %v958 = vunpack.c.l.b16 %v439
      %v959 = vunpack.c.l.b16 %v440
      %v960 = vunpack.c.l.b16 %v441
      %v961 = vunpack.c.l.b16 %v442
      %v962 = vunpack.c.l.b16 %v443
      %v963 = vunpack.c.l.b16 %v444
      %v964 = vunpack.c.l.b16 %v445
      %v965 = vunpack.c.l.b16 %v446
      %v966 = vunpack.c.l.b16 %v447
      %v967 = vunpack.c.l.b16 %v448
      %v968 = vunpack.c.l.b16 %v449
      %v969 = vunpack.c.l.b16 %v450
      %v970 = vunpack.c.l.b16 %v451
      %v971 = vunpack.c.l.b16 %v452
      %v972 = vunpack.c.l.b16 %v453
      %v973 = vunpack.c.l.b16 %v454
      %v974 = vunpack.c.l.b16 %v455
      %v975 = vunpack.c.l.b16 %v456
      %v976 = vunpack.c.l.b16 %v457
      %v977 = vunpack.c.l.b16 %v458
      %v978 = vunpack.c.l.b16 %v459
      %v979 = vunpack.c.l.b16 %v460
      %v980 = vunpack.c.l.b16 %v461
      %v981 = vunpack.c.l.b16 %v462
      %v982 = vunpack.c.l.b16 %v463
      %v983 = vunpack.c.l.b16 %v464
      %v984 = vunpack.c.l.b16 %v465
      %v985 = vunpack.c.l.b16 %v466
      %v986 = vunpack.c.l.b16 %v467
      %v987 = vunpack.c.l.b16 %v468
      %v988 = vunpack.c.l.b16 %v469
      %v989 = vunpack.c.l.b16 %v470
      %v990 = vunpack.c.l.b16 %v471
      %v991 = vunpack.c.l.b16 %v472
      %v992 = vunpack.c.l.b16 %v473
      %v993 = vunpack.c.l.b16 %v474
      %v994 = vunpack.c.l.b16 %v475
      %v995 = vunpack.c.l.b16 %v476
      %v996 = vunpack.c.l.b16 %v477
      %v997 = vunpack.c.l.b16 %v478
      %v998 = vunpack.c.l.b16 %v479
      %v999 = vunpack.c.l.b16 %v480
      %v1000 = vunpack.c.l.b16 %v481
      %v1001 = vunpack.c.l.b16 %v482
      %v1002 = vunpack.c.l.b16 %v483
      %v1003 = vunpack.c.l.b16 %v484
      %v1004 = vunpack.c.l.b16 %v485
      %v1005 = vunpack.c.l.b16 %v486
      %v1006 = vunpack.c.l.b16 %v487
      %v1007 = vunpack.c.l.b16 %v488
      %v1008 = vunpack.c.l.b16 %v489
      %v1009 = vunpack.c.l.b16 %v490
      %v1010 = vunpack.c.l.b16 %v491
      %v1011 = vunpack.c.l.b16 %v492
      %v1012 = vunpack.c.l.b16 %v493
      %v1013 = vunpack.c.l.b16 %v494
      %v1014 = vunpack.c.l.b16 %v495
      %v1015 = vunpack.c.l.b16 %v496
      %v1016 = vunpack.c.l.b16 %v497
      %v1017 = vunpack.c.l.b16 %v498
      %v1018 = vunpack.c.l.b16 %v499
      %v1019 = vunpack.c.l.b16 %v500
      %v1020 = vunpack.c.l.b16 %v501
      %v1021 = vunpack.c.l.b16 %v502
      %v1022 = vunpack.c.l.b16 %v503
      %v1023 = vunpack.c.l.b16 %v504
      %v1024 = vunpack.c.l.b16 %v505
      %v1025 = vunpack.c.l.b16 %v506
      %v1026 = vunpack.c.l.b16 %v507
      %v1027 = vunpack.c.l.b16 %v508
      %v1028 = vunpack.c.l.b16 %v509
      %v1029 = vunpack.c.l.b16 %v510
      %v1030 = vunpack.c.l.b16 %v511
      %v1031 = vunpack.c.l.b16 %v512
      %v1032 = vunpack.c.l.b16 %v513
      %v1033 = vunpack.c.l.b16 %v514
      %v1034 = vunpack.c.l.b16 %v515
      %v1035 = vpack.c.b16 %v924, %v923
      %v1036 = vpack.c.b16 %v926, %v925
      %v1037 = vpack.c.b16 %v928, %v927
      %v1038 = vpack.c.b16 %v930, %v929
      %v1039 = vpack.c.b16 %v932, %v931
      %v1040 = vpack.c.b16 %v934, %v933
      %v1041 = vpack.c.b16 %v936, %v935
      %v1042 = vpack.c.b16 %v938, %v937
      %v1043 = vpack.c.b16 %v940, %v939
      %v1044 = vpack.c.b16 %v942, %v941
      %v1045 = vpack.c.b16 %v944, %v943
      %v1046 = vpack.c.b16 %v946, %v945
      %v1047 = vpack.c.b16 %v948, %v947
      %v1048 = vpack.c.b16 %v950, %v949
      %v1049 = vpack.c.b16 %v952, %v951
      %v1050 = vpack.c.b16 %v954, %v953
      %v1051 = vpack.c.b16 %v956, %v955
      %v1052 = vpack.c.b16 %v958, %v957
      %v1053 = vpack.c.b16 %v960, %v959
      %v1054 = vpack.c.b16 %v962, %v961
      %v1055 = vpack.c.b16 %v964, %v963
      %v1056 = vpack.c.b16 %v966, %v965
      %v1057 = vpack.c.b16 %v968, %v967
      %v1058 = vpack.c.b16 %v970, %v969
      %v1059 = vpack.c.b16 %v972, %v971
      %v1060 = vpack.c.b16 %v974, %v973
      %v1061 = vpack.c.b16 %v976, %v975
      %v1062 = vpack.c.b16 %v978, %v977
      %v1063 = vpack.c.b16 %v980, %v979
      %v1064 = vpack.c.b16 %v982, %v981
      %v1065 = vpack.c.b16 %v984, %v983
      %v1066 = vpack.c.b16 %v986, %v985
      %v1067 = vpack.c.b16 %v988, %v987
      %v1068 = vpack.c.b16 %v990, %v989
      %v1069 = vpack.c.b16 %v992, %v991
      %v1070 = vpack.c.b16 %v994, %v993
      %v1071 = vpack.c.b16 %v996, %v995
      %v1072 = vpack.c.b16 %v998, %v997
      %v1073 = vpack.c.b16 %v1000, %v999
      %v1074 = vpack.c.b16 %v1002, %v1001
      %v1075 = vpack.c.b16 %v1004, %v1003
      %v1076 = vpack.c.b16 %v1006, %v1005
      %v1077 = vpack.c.b16 %v1008, %v1007
      %v1078 = vpack.c.b16 %v1010, %v1009
      %v1079 = vpack.c.b16 %v1012, %v1011
      %v1080 = vpack.c.b16 %v1014, %v1013
      %v1081 = vpack.c.b16 %v1016, %v1015
      %v1082 = vpack.c.b16 %v1018, %v1017
      %v1083 = vpack.c.b16 %v1020, %v1019
      %v1084 = vpack.c.b16 %v1022, %v1021
      %v1085 = vpack.c.b16 %v1024, %v1023
      %v1086 = vpack.c.b16 %v1026, %v1025
      %v1087 = vpack.c.b16 %v1028, %v1027
      %v1088 = vpack.c.b16 %v1030, %v1029
      %v1089 = vpack.c.b16 %v1032, %v1031
      %v1090 = vpack.c.b16 %v1034, %v1033
      %1147 = vmatprep.subr.bf16.mxu0 0
      %1148 = vmatpush1.bf16.msra.mxu0 %v1035
      %1149 = vmatprep.subr.bf16.mxu0 0
      %1150 = vmatpush1.bf16.msra.mxu0 %v1036
      %1151 = vmatprep.subr.bf16.mxu0 0
      %1152 = vmatpush1.bf16.msra.mxu0 %v1037
      %1153 = vmatprep.subr.bf16.mxu0 0
      %1154 = vmatpush1.bf16.msra.mxu0 %v1038
      %1155 = vmatprep.subr.bf16.mxu0 0
      %1156 = vmatpush1.bf16.msra.mxu0 %v1039
      %1157 = vmatprep.subr.bf16.mxu0 0
      %1158 = vmatpush1.bf16.msra.mxu0 %v1040
      %1159 = vmatprep.subr.bf16.mxu0 0
      %1160 = vmatpush1.bf16.msra.mxu0 %v1041
      %1161 = vmatprep.subr.bf16.mxu0 0
      %1162 = vmatpush1.bf16.msra.mxu0 %v1042
      %1163 = vmatprep.subr.bf16.mxu0 0
      %1164 = vmatpush1.bf16.msra.mxu0 %v1043
      %1165 = vmatprep.subr.bf16.mxu0 0
      %1166 = vmatpush1.bf16.msra.mxu0 %v1044
      %1167 = vmatprep.subr.bf16.mxu0 0
      %1168 = vmatpush1.bf16.msra.mxu0 %v1045
      %1169 = vmatprep.subr.bf16.mxu0 0
      %1170 = vmatpush1.bf16.msra.mxu0 %v1046
      %1171 = vmatprep.subr.bf16.mxu0 0
      %1172 = vmatpush1.bf16.msra.mxu0 %v1047
      %1173 = vmatprep.subr.bf16.mxu0 0
      %1174 = vmatpush1.bf16.msra.mxu0 %v1048
      %1175 = vmatprep.subr.bf16.mxu0 0
      %1176 = vmatpush1.bf16.msra.mxu0 %v1049
      %1177 = vmatprep.subr.bf16.mxu0 0
      %1178 = vmatpush1.bf16.msra.mxu0 %v1050
      %1179 = vmatprep.mubr.bf16.mxu0 %v700
      %1180 = vmatmul.mubr.bf16.gmra.mrb[0].mxu0 %v699
      %v1181 = vpop.f32.mrb[0].mxu0
      %v1182 = vadd.f32 %v521, %v1181
      %v1183 = vpop.f32.mrb[0].mxu0
      %v1184 = vpop.f32.mrb[0].mxu0
      %v1185 = vadd.f32 %v521, %v1184
      %v1186 = vpop.f32.mrb[0].mxu0
      %1187 = vmatprep.mubr.bf16.mxu0 %v707
      %1188 = vmatmul.mubr.bf16.gmra.mrb[0].mxu0 %v706
      %v1189 = vpop.f32.mrb[0].mxu0
      %v1190 = vadd.f32 %v521, %v1189
      %v1191 = vpop.f32.mrb[0].mxu0
      %v1192 = vpop.f32.mrb[0].mxu0
      %v1193 = vadd.f32 %v521, %v1192
      %v1194 = vpop.f32.mrb[0].mxu0
      %1195 = vmatprep.mubr.bf16.mxu0 %v714
      %1196 = vmatmul.mubr.bf16.gmra.mrb[0].mxu0 %v713
      %v1197 = vpop.f32.mrb[0].mxu0
      %v1198 = vadd.f32 %v521, %v1197
      %v1199 = vpop.f32.mrb[0].mxu0
      %v1200 = vpop.f32.mrb[0].mxu0
      %v1201 = vadd.f32 %v521, %v1200
      %v1202 = vpop.f32.mrb[0].mxu0
      %1203 = vmatprep.mubr.bf16.mxu0 %v721
      %1204 = vmatmul.mubr.bf16.gmra.mrb[0].mxu0 %v720
      %v1205 = vpop.f32.mrb[0].mxu0
      %v1206 = vadd.f32 %v521, %v1205
      %v1207 = vpop.f32.mrb[0].mxu0
      %v1208 = vpop.f32.mrb[0].mxu0
      %v1209 = vadd.f32 %v521, %v1208
      %v1210 = vpop.f32.mrb[0].mxu0
      %1211 = vmatprep.mubr.bf16.mxu0 %v728
      %1212 = vmatmul.mubr.bf16.gmra.mrb[0].mxu0 %v727
      %v1213 = vpop.f32.mrb[0].mxu0
      %v1214 = vadd.f32 %v521, %v1213
      %v1215 = vpop.f32.mrb[0].mxu0
      %v1216 = vpop.f32.mrb[0].mxu0
      %v1217 = vadd.f32 %v521, %v1216
      %v1218 = vpop.f32.mrb[0].mxu0
      %1219 = vmatprep.mubr.bf16.mxu0 %v735
      %1220 = vmatmul.mubr.bf16.gmra.mrb[0].mxu0 %v734
      %v1221 = vpop.f32.mrb[0].mxu0
      %v1222 = vadd.f32 %v521, %v1221
      %v1223 = vpop.f32.mrb[0].mxu0
      %v1224 = vpop.f32.mrb[0].mxu0
      %v1225 = vadd.f32 %v521, %v1224
      %v1226 = vpop.f32.mrb[0].mxu0
      %1227 = vmatprep.mubr.bf16.mxu0 %v742
      %1228 = vmatmul.mubr.bf16.gmra.mrb[0].mxu0 %v741
      %v1229 = vpop.f32.mrb[0].mxu0
      %v1230 = vadd.f32 %v521, %v1229
      %v1231 = vpop.f32.mrb[0].mxu0
      %v1232 = vpop.f32.mrb[0].mxu0
      %v1233 = vadd.f32 %v521, %v1232
      %v1234 = vpop.f32.mrb[0].mxu0
      %1235 = vmatprep.mubr.bf16.mxu0 %v749
      %1236 = vmatmul.mubr.bf16.gmra.mrb[0].mxu0 %v748
      %v1237 = vpop.f32.mrb[0].mxu0
      %v1238 = vadd.f32 %v521, %v1237
      %v1239 = vpop.f32.mrb[0].mxu0
      %v1240 = vpop.f32.mrb[0].mxu0
      %v1241 = vadd.f32 %v521, %v1240
      %v1242 = vpop.f32.mrb[0].mxu0
      %1243 = vdwg.mxu0
      %1244 = vmatprep.subr.bf16.mxu0 0
      %1245 = vmatpush1.bf16.msra.mxu0 %v1051
      %1246 = vmatprep.subr.bf16.mxu0 0
      %1247 = vmatpush1.bf16.msra.mxu0 %v1052
      %1248 = vmatprep.subr.bf16.mxu0 0
      %1249 = vmatpush1.bf16.msra.mxu0 %v1053
      %1250 = vmatprep.subr.bf16.mxu0 0
      %1251 = vmatpush1.bf16.msra.mxu0 %v1054
      %1252 = vmatprep.subr.bf16.mxu0 0
      %1253 = vmatpush1.bf16.msra.mxu0 %v1055
      %1254 = vmatprep.subr.bf16.mxu0 0
      %1255 = vmatpush1.bf16.msra.mxu0 %v1056
      %1256 = vmatprep.subr.bf16.mxu0 0
      %1257 = vmatpush1.bf16.msra.mxu0 %v1057
      %1258 = vmatprep.subr.bf16.mxu0 0
      %1259 = vmatpush1.bf16.msra.mxu0 %v1058
      %1260 = vmatprep.subr.bf16.mxu0 0
      %1261 = vmatpush1.bf16.msra.mxu0 %v1059
      %1262 = vmatprep.subr.bf16.mxu0 0
      %1263 = vmatpush1.bf16.msra.mxu0 %v1060
      %1264 = vmatprep.subr.bf16.mxu0 0
      %1265 = vmatpush1.bf16.msra.mxu0 %v1061
      %1266 = vmatprep.subr.bf16.mxu0 0
      %1267 = vmatpush1.bf16.msra.mxu0 %v1062
      %1268 = vmatprep.subr.bf16.mxu0 0
      %1269 = vmatpush1.bf16.msra.mxu0 %v1063
      %1270 = vmatprep.subr.bf16.mxu0 0
      %1271 = vmatpush1.bf16.msra.mxu0 %v1064
      %1272 = vmatprep.subr.bf16.mxu0 0
      %1273 = vmatpush1.bf16.msra.mxu0 %v1065
      %1274 = vmatprep.subr.bf16.mxu0 0
      %1275 = vmatpush1.bf16.msra.mxu0 %v1066
      %1276 = vmatprep.mubr.bf16.mxu0 %v702
      %1277 = vmatmul.mubr.bf16.gmra.mrb[0].mxu0 %v701
      %v1278 = vpop.f32.mrb[0].mxu0
      %v1279 = vadd.f32 %v1182, %v1278
      %v1280 = vpop.f32.mrb[0].mxu0
      %v1281 = vpop.f32.mrb[0].mxu0
      %v1282 = vadd.f32 %v1185, %v1281
      %v1283 = vpop.f32.mrb[0].mxu0
      %1284 = vmatprep.mubr.bf16.mxu0 %v709
      %1285 = vmatmul.mubr.bf16.gmra.mrb[0].mxu0 %v708
      %v1286 = vpop.f32.mrb[0].mxu0
      %v1287 = vadd.f32 %v1190, %v1286
      %v1288 = vpop.f32.mrb[0].mxu0
      %v1289 = vpop.f32.mrb[0].mxu0
      %v1290 = vadd.f32 %v1193, %v1289
      %v1291 = vpop.f32.mrb[0].mxu0
      %1292 = vmatprep.mubr.bf16.mxu0 %v716
      %1293 = vmatmul.mubr.bf16.gmra.mrb[0].mxu0 %v715
      %v1294 = vpop.f32.mrb[0].mxu0
      %v1295 = vadd.f32 %v1198, %v1294
      %v1296 = vpop.f32.mrb[0].mxu0
      %v1297 = vpop.f32.mrb[0].mxu0
      %v1298 = vadd.f32 %v1201, %v1297
      %v1299 = vpop.f32.mrb[0].mxu0
      %1300 = vmatprep.mubr.bf16.mxu0 %v723
      %1301 = vmatmul.mubr.bf16.gmra.mrb[0].mxu0 %v722
      %v1302 = vpop.f32.mrb[0].mxu0
      %v1303 = vadd.f32 %v1206, %v1302
      %v1304 = vpop.f32.mrb[0].mxu0
      %v1305 = vpop.f32.mrb[0].mxu0
      %v1306 = vadd.f32 %v1209, %v1305
      %v1307 = vpop.f32.mrb[0].mxu0
      %1308 = vmatprep.mubr.bf16.mxu0 %v730
      %1309 = vmatmul.mubr.bf16.gmra.mrb[0].mxu0 %v729
      %v1310 = vpop.f32.mrb[0].mxu0
      %v1311 = vadd.f32 %v1214, %v1310
      %v1312 = vpop.f32.mrb[0].mxu0
      %v1313 = vpop.f32.mrb[0].mxu0
      %v1314 = vadd.f32 %v1217, %v1313
      %v1315 = vpop.f32.mrb[0].mxu0
      %1316 = vmatprep.mubr.bf16.mxu0 %v737
      %1317 = vmatmul.mubr.bf16.gmra.mrb[0].mxu0 %v736
      %v1318 = vpop.f32.mrb[0].mxu0
      %v1319 = vadd.f32 %v1222, %v1318
      %v1320 = vpop.f32.mrb[0].mxu0
      %v1321 = vpop.f32.mrb[0].mxu0
      %v1322 = vadd.f32 %v1225, %v1321
      %v1323 = vpop.f32.mrb[0].mxu0
      %1324 = vmatprep.mubr.bf16.mxu0 %v744
      %1325 = vmatmul.mubr.bf16.gmra.mrb[0].mxu0 %v743
      %v1326 = vpop.f32.mrb[0].mxu0
      %v1327 = vadd.f32 %v1230, %v1326
      %v1328 = vpop.f32.mrb[0].mxu0
      %v1329 = vpop.f32.mrb[0].mxu0
      %v1330 = vadd.f32 %v1233, %v1329
      %v1331 = vpop.f32.mrb[0].mxu0
      %1332 = vmatprep.mubr.bf16.mxu0 %v751
      %1333 = vmatmul.mubr.bf16.gmra.mrb[0].mxu0 %v750
      %v1334 = vpop.f32.mrb[0].mxu0
      %v1335 = vadd.f32 %v1238, %v1334
      %v1336 = vpop.f32.mrb[0].mxu0
      %v1337 = vpop.f32.mrb[0].mxu0
      %v1338 = vadd.f32 %v1241, %v1337
      %v1339 = vpop.f32.mrb[0].mxu0
      %1340 = vdwg.mxu0
      %1341 = vmatprep.subr.bf16.mxu0 0
      %1342 = vmatpush1.bf16.msra.mxu0 %v1067
      %1343 = vmatprep.subr.bf16.mxu0 0
      %1344 = vmatpush1.bf16.msra.mxu0 %v1068
      %1345 = vmatprep.subr.bf16.mxu0 0
      %1346 = vmatpush1.bf16.msra.mxu0 %v1069
      %1347 = vmatprep.subr.bf16.mxu0 0
      %1348 = vmatpush1.bf16.msra.mxu0 %v1070
      %1349 = vmatprep.subr.bf16.mxu0 0
      %1350 = vmatpush1.bf16.msra.mxu0 %v1071
      %1351 = vmatprep.subr.bf16.mxu0 0
      %1352 = vmatpush1.bf16.msra.mxu0 %v1072
      %1353 = vmatprep.subr.bf16.mxu0 0
      %1354 = vmatpush1.bf16.msra.mxu0 %v1073
      %1355 = vmatprep.subr.bf16.mxu0 0
      %1356 = vmatpush1.bf16.msra.mxu0 %v1074
      %1357 = vmatprep.subr.bf16.mxu0 0
      %1358 = vmatpush1.bf16.msra.mxu0 %v1075
      %1359 = vmatprep.subr.bf16.mxu0 0
      %1360 = vmatpush1.bf16.msra.mxu0 %v1076
      %1361 = vmatprep.subr.bf16.mxu0 0
      %1362 = vmatpush1.bf16.msra.mxu0 %v1077
      %1363 = vmatprep.subr.bf16.mxu0 0
      %1364 = vmatpush1.bf16.msra.mxu0 %v1078
      %1365 = vmatprep.subr.bf16.mxu0 0
      %1366 = vmatpush1.bf16.msra.mxu0 %v1079
      %1367 = vmatprep.subr.bf16.mxu0 0
      %1368 = vmatpush1.bf16.msra.mxu0 %v1080
      %1369 = vmatprep.subr.bf16.mxu0 0
      %1370 = vmatpush1.bf16.msra.mxu0 %v1081
      %1371 = vmatprep.subr.bf16.mxu0 0
      %1372 = vmatpush1.bf16.msra.mxu0 %v1082
      %1373 = vmatprep.mubr.bf16.mxu0 %v704
      %1374 = vmatmul.mubr.bf16.gmra.mrb[0].mxu0 %v703
      %v1375 = vpop.f32.mrb[0].mxu0
      %v1376 = vadd.f32 %v1279, %v1375
      %v1377 = vpop.f32.mrb[0].mxu0
      %v1378 = vpop.f32.mrb[0].mxu0
      %v1379 = vadd.f32 %v1282, %v1378
      %v1380 = vpop.f32.mrb[0].mxu0
      %1381 = vmatprep.mubr.bf16.mxu0 %v711
      %1382 = vmatmul.mubr.bf16.gmra.mrb[0].mxu0 %v710
      %v1383 = vpop.f32.mrb[0].mxu0
      %v1384 = vadd.f32 %v1287, %v1383
      %v1385 = vpop.f32.mrb[0].mxu0
      %v1386 = vpop.f32.mrb[0].mxu0
      %v1387 = vadd.f32 %v1290, %v1386
      %v1388 = vpop.f32.mrb[0].mxu0
      %1389 = vmatprep.mubr.bf16.mxu0 %v718
      %1390 = vmatmul.mubr.bf16.gmra.mrb[0].mxu0 %v717
      %v1391 = vpop.f32.mrb[0].mxu0
      %v1392 = vadd.f32 %v1295, %v1391
      %v1393 = vpop.f32.mrb[0].mxu0
      %v1394 = vpop.f32.mrb[0].mxu0
      %v1395 = vadd.f32 %v1298, %v1394
      %v1396 = vpop.f32.mrb[0].mxu0
      %1397 = vmatprep.mubr.bf16.mxu0 %v725
      %1398 = vmatmul.mubr.bf16.gmra.mrb[0].mxu0 %v724
      %v1399 = vpop.f32.mrb[0].mxu0
      %v1400 = vadd.f32 %v1303, %v1399
      %v1401 = vpop.f32.mrb[0].mxu0
      %v1402 = vpop.f32.mrb[0].mxu0
      %v1403 = vadd.f32 %v1306, %v1402
      %v1404 = vpop.f32.mrb[0].mxu0
      %1405 = vmatprep.mubr.bf16.mxu0 %v732
      %1406 = vmatmul.mubr.bf16.gmra.mrb[0].mxu0 %v731
      %v1407 = vpop.f32.mrb[0].mxu0
      %v1408 = vadd.f32 %v1311, %v1407
      %v1409 = vpop.f32.mrb[0].mxu0
      %v1410 = vpop.f32.mrb[0].mxu0
      %v1411 = vadd.f32 %v1314, %v1410
      %v1412 = vpop.f32.mrb[0].mxu0
      %1413 = vmatprep.mubr.bf16.mxu0 %v739
      %1414 = vmatmul.mubr.bf16.gmra.mrb[0].mxu0 %v738
      %v1415 = vpop.f32.mrb[0].mxu0
      %v1416 = vadd.f32 %v1319, %v1415
      %v1417 = vpop.f32.mrb[0].mxu0
      %v1418 = vpop.f32.mrb[0].mxu0
      %v1419 = vadd.f32 %v1322, %v1418
      %v1420 = vpop.f32.mrb[0].mxu0
      %1421 = vmatprep.mubr.bf16.mxu0 %v746
      %1422 = vmatmul.mubr.bf16.gmra.mrb[0].mxu0 %v745
      %v1423 = vpop.f32.mrb[0].mxu0
      %v1424 = vadd.f32 %v1327, %v1423
      %v1425 = vpop.f32.mrb[0].mxu0
      %v1426 = vpop.f32.mrb[0].mxu0
      %v1427 = vadd.f32 %v1330, %v1426
      %v1428 = vpop.f32.mrb[0].mxu0
      %1429 = vmatprep.mubr.bf16.mxu0 %v753
      %1430 = vmatmul.mubr.bf16.gmra.mrb[0].mxu0 %v752
      %v1431 = vpop.f32.mrb[0].mxu0
      %v1432 = vadd.f32 %v1335, %v1431
      %v1433 = vpop.f32.mrb[0].mxu0
      %v1434 = vpop.f32.mrb[0].mxu0
      %v1435 = vadd.f32 %v1338, %v1434
      %v1436 = vpop.f32.mrb[0].mxu0
      %1437 = vdwg.mxu0
      %1438 = vmatprep.subr.bf16.mxu0 0
      %1439 = vmatpush1.bf16.msra.mxu0 %v1083
      %1440 = vmatprep.subr.bf16.mxu0 0
      %1441 = vmatpush1.bf16.msra.mxu0 %v1084
      %1442 = vmatprep.subr.bf16.mxu0 0
      %1443 = vmatpush1.bf16.msra.mxu0 %v1085
      %1444 = vmatprep.subr.bf16.mxu0 0
      %1445 = vmatpush1.bf16.msra.mxu0 %v1086
      %1446 = vmatprep.subr.bf16.mxu0 0
      %1447 = vmatpush1.bf16.msra.mxu0 %v1087
      %1448 = vmatprep.subr.bf16.mxu0 0
      %1449 = vmatpush1.bf16.msra.mxu0 %v1088
      %1450 = vmatprep.subr.bf16.mxu0 0
      %1451 = vmatpush1.bf16.msra.mxu0 %v1089
      %1452 = vmatprep.subr.bf16.mxu0 0
      %1453 = vmatpush1.bf16.msra.mxu0 %v1090
      %1454 = vmatprep.subr.bf16.mxu0 0
      %1455 = vmatpush1.bf16.msra.mxu0 0
      %1456 = vmatprep.subr.bf16.mxu0 0
      %1457 = vmatpush1.bf16.msra.mxu0 0
      %1458 = vmatprep.subr.bf16.mxu0 0
      %1459 = vmatpush1.bf16.msra.mxu0 0
      %1460 = vmatprep.subr.bf16.mxu0 0
      %1461 = vmatpush1.bf16.msra.mxu0 0
      %1462 = vmatprep.subr.bf16.mxu0 0
      %1463 = vmatpush1.bf16.msra.mxu0 0
      %1464 = vmatprep.subr.bf16.mxu0 0
      %1465 = vmatpush1.bf16.msra.mxu0 0
      %1466 = vmatprep.subr.bf16.mxu0 0
      %1467 = vmatpush1.bf16.msra.mxu0 0
      %1468 = vmatprep.subr.bf16.mxu0 0
      %1469 = vmatpush1.bf16.msra.mxu0 0
      %1470 = vmatprep.mubr.bf16.mxu0 0
      %1471 = vmatmul.mubr.bf16.gmra.mrb[0].mxu0 %v705
      %v1472 = vpop.f32.mrb[0].mxu0
      %v1473 = vadd.f32 %v1376, %v1472
      %v1474 = vpop.f32.mrb[0].mxu0
      %v1475 = vpop.f32.mrb[0].mxu0
      %v1476 = vadd.f32 %v1379, %v1475
      %v1477 = vpop.f32.mrb[0].mxu0
      %1478 = vmatprep.mubr.bf16.mxu0 0
      %1479 = vmatmul.mubr.bf16.gmra.mrb[0].mxu0 %v712
      %v1480 = vpop.f32.mrb[0].mxu0
      %v1481 = vadd.f32 %v1384, %v1480
      %v1482 = vpop.f32.mrb[0].mxu0
      %v1483 = vpop.f32.mrb[0].mxu0
      %v1484 = vadd.f32 %v1387, %v1483
      %v1485 = vpop.f32.mrb[0].mxu0
      %1486 = vmatprep.mubr.bf16.mxu0 0
      %1487 = vmatmul.mubr.bf16.gmra.mrb[0].mxu0 %v719
      %v1488 = vpop.f32.mrb[0].mxu0
      %v1489 = vadd.f32 %v1392, %v1488
      %v1490 = vpop.f32.mrb[0].mxu0
      %v1491 = vpop.f32.mrb[0].mxu0
      %v1492 = vadd.f32 %v1395, %v1491
      %v1493 = vpop.f32.mrb[0].mxu0
      %1494 = vmatprep.mubr.bf16.mxu0 0
      %1495 = vmatmul.mubr.bf16.gmra.mrb[0].mxu0 %v726
      %v1496 = vpop.f32.mrb[0].mxu0
      %v1497 = vadd.f32 %v1400, %v1496
      %v1498 = vpop.f32.mrb[0].mxu0
      %v1499 = vpop.f32.mrb[0].mxu0
      %v1500 = vadd.f32 %v1403, %v1499
      %v1501 = vpop.f32.mrb[0].mxu0
      %1502 = vmatprep.mubr.bf16.mxu0 0
      %1503 = vmatmul.mubr.bf16.gmra.mrb[0].mxu0 %v733
      %v1504 = vpop.f32.mrb[0].mxu0
      %v1505 = vadd.f32 %v1408, %v1504
      %v1506 = vpop.f32.mrb[0].mxu0
      %v1507 = vpop.f32.mrb[0].mxu0
      %v1508 = vadd.f32 %v1411, %v1507
      %v1509 = vpop.f32.mrb[0].mxu0
      %1510 = vmatprep.mubr.bf16.mxu0 0
      %1511 = vmatmul.mubr.bf16.gmra.mrb[0].mxu0 %v740
      %v1512 = vpop.f32.mrb[0].mxu0
      %v1513 = vadd.f32 %v1416, %v1512
      %v1514 = vpop.f32.mrb[0].mxu0
      %v1515 = vpop.f32.mrb[0].mxu0
      %v1516 = vadd.f32 %v1419, %v1515
      %v1517 = vpop.f32.mrb[0].mxu0
      %1518 = vmatprep.mubr.bf16.mxu0 0
      %1519 = vmatmul.mubr.bf16.gmra.mrb[0].mxu0 %v747
      %v1520 = vpop.f32.mrb[0].mxu0
      %v1521 = vadd.f32 %v1424, %v1520
      %v1522 = vpop.f32.mrb[0].mxu0
      %v1523 = vpop.f32.mrb[0].mxu0
      %v1524 = vadd.f32 %v1427, %v1523
      %v1525 = vpop.f32.mrb[0].mxu0
      %1526 = vmatprep.mubr.bf16.mxu0 0
      %1527 = vmatmul.mubr.bf16.gmra.mrb[0].mxu0 %v754
      %v1528 = vpop.f32.mrb[0].mxu0
      %v1529 = vadd.f32 %v1432, %v1528
      %v1530 = vpop.f32.mrb[0].mxu0
      %v1531 = vpop.f32.mrb[0].mxu0
      %v1532 = vadd.f32 %v1435, %v1531
      %v1533 = vpop.f32.mrb[0].mxu0
      %1534 = vdwg.mxu0
      %v1535 = vmax.f32 %v1473, 0.0
      %v1536 = vmax.f32 %v1476, 0.0
      %v1537 = vmax.f32 %v1481, 0.0
      %v1538 = vmax.f32 %v1484, 0.0
      %v1539 = vmax.f32 %v1489, 0.0
      %v1540 = vmax.f32 %v1492, 0.0
      %v1541 = vmax.f32 %v1497, 0.0
      %v1542 = vmax.f32 %v1500, 0.0
      %v1543 = vmax.f32 %v1505, 0.0
      %v1544 = vmax.f32 %v1508, 0.0
      %v1545 = vmax.f32 %v1513, 0.0
      %v1546 = vmax.f32 %v1516, 0.0
      %v1547 = vmax.f32 %v1521, 0.0
      %v1548 = vmax.f32 %v1524, 0.0
      %v1549 = vmax.f32 %v1529, 0.0
      %v1550 = vmax.f32 %v1532, 0.0
      %v1551 = vpack.c.bf16 %v1536, %v1535
      %v1552 = vpack.c.bf16 %v1538, %v1537
      %v1553 = vpack.c.bf16 %v1540, %v1539
      %v1554 = vpack.c.bf16 %v1542, %v1541
      %v1555 = vpack.c.bf16 %v1544, %v1543
      %v1556 = vpack.c.bf16 %v1546, %v1545
      %v1557 = vpack.c.bf16 %v1548, %v1547
      %v1558 = vpack.c.bf16 %v1550, %v1549
      %v1559 = vld [vmem:[%s3] sm:$0xf]
      %v1560 = vld [vmem:[%s3 + $0x4] sm:$0xf]
      %v1561 = vld [vmem:[%s3 + $0x8] sm:$0xf]
      %v1562 = vld [vmem:[%s3 + $0xc] sm:$0xf]
      %v1563 = vld [vmem:[%s3 + $0x10] sm:$0xf]
      %v1564 = vld [vmem:[%s3 + $0x14] sm:$0xf]
      %v1565 = vld [vmem:[%s3 + $0x18] sm:$0xf]
      %v1566 = vld [vmem:[%s3 + $0x1c] sm:$0xf]
      %v1567 = vld [vmem:[%s4] sm:$0x1]
      %v1569 = vlaneseq
      %v1570 = vshrl.u32 %v1569, 7
      %v1571 = vsub.s32 0, %v1570
      %v1572 = vrot.slane %v1567, %v1571
      %v1582 = vunpack.c.l.b16 %v1559
      %v1583 = vunpack.c.l.b16 %v1560
      %v1584 = vunpack.c.l.b16 %v1561
      %v1585 = vunpack.c.l.b16 %v1562
      %v1586 = vunpack.c.l.b16 %v1563
      %v1587 = vunpack.c.l.b16 %v1564
      %v1588 = vunpack.c.l.b16 %v1565
      %v1589 = vunpack.c.l.b16 %v1566
      %v1590 = vpack.c.b16 %v1583, %v1582
      %v1591 = vpack.c.b16 %v1585, %v1584
      %v1592 = vpack.c.b16 %v1587, %v1586
      %v1593 = vpack.c.b16 %v1589, %v1588
      %vm1598 = vcmask 523264
      %v1600 = vsel %vm1598, %v1551, 0
      %v1603 = vsel %vm1598, %v1552, 0
      %v1606 = vsel %vm1598, %v1553, 0
      %v1609 = vsel %vm1598, %v1554, 0
      %v1612 = vsel %vm1598, %v1555, 0
      %v1615 = vsel %vm1598, %v1556, 0
      %v1618 = vsel %vm1598, %v1557, 0
      %v1621 = vsel %vm1598, %v1558, 0
      %1623 = vmatprep.subr.bf16.mxu0 0
      %1624 = vmatpush1.bf16.msra.mxu0 %v1590
      %1625 = vmatprep.subr.bf16.mxu0 0
      %1626 = vmatpush1.bf16.msra.mxu0 %v1591
      %1627 = vmatprep.subr.bf16.mxu0 0
      %1628 = vmatpush1.bf16.msra.mxu0 %v1592
      %1629 = vmatprep.subr.bf16.mxu0 0
      %1630 = vmatpush1.bf16.msra.mxu0 %v1593
      %1631 = vmatprep.subr.bf16.mxu0 0
      %1632 = vmatpush1.bf16.msra.mxu0 0
      %1633 = vmatprep.subr.bf16.mxu0 0
      %1634 = vmatpush1.bf16.msra.mxu0 0
      %1635 = vmatprep.subr.bf16.mxu0 0
      %1636 = vmatpush1.bf16.msra.mxu0 0
      %1637 = vmatprep.subr.bf16.mxu0 0
      %1638 = vmatpush1.bf16.msra.mxu0 0
      %1639 = vmatprep.subr.bf16.mxu0 0
      %1640 = vmatpush1.bf16.msra.mxu0 0
      %1641 = vmatprep.subr.bf16.mxu0 0
      %1642 = vmatpush1.bf16.msra.mxu0 0
      %1643 = vmatprep.subr.bf16.mxu0 0
      %1644 = vmatpush1.bf16.msra.mxu0 0
      %1645 = vmatprep.subr.bf16.mxu0 0
      %1646 = vmatpush1.bf16.msra.mxu0 0
      %1647 = vmatprep.subr.bf16.mxu0 0
      %1648 = vmatpush1.bf16.msra.mxu0 0
      %1649 = vmatprep.subr.bf16.mxu0 0
      %1650 = vmatpush1.bf16.msra.mxu0 0
      %1651 = vmatprep.subr.bf16.mxu0 0
      %1652 = vmatpush1.bf16.msra.mxu0 0
      %1653 = vmatprep.subr.bf16.mxu0 0
      %1654 = vmatpush1.bf16.msra.mxu0 0
      %1655 = vmatprep.mubr.bf16.mxu0 0
      %1656 = vmatmul.mubr.bf16.gmra.mrb[0].mxu0 %v1600
      %v1657 = vpop.f32.mrb[0].mxu0
      %v1658 = vadd.f32 %v1572, %v1657
      %v1659 = vpop.f32.mrb[0].mxu0
      %v1660 = vpop.f32.mrb[0].mxu0
      %v1661 = vadd.f32 %v1572, %v1660
      %v1662 = vpop.f32.mrb[0].mxu0
      %1663 = vmatprep.mubr.bf16.mxu0 0
      %1664 = vmatmul.mubr.bf16.gmra.mrb[0].mxu0 %v1603
      %v1665 = vpop.f32.mrb[0].mxu0
      %v1666 = vadd.f32 %v1572, %v1665
      %v1667 = vpop.f32.mrb[0].mxu0
      %v1668 = vpop.f32.mrb[0].mxu0
      %v1669 = vadd.f32 %v1572, %v1668
      %v1670 = vpop.f32.mrb[0].mxu0
      %1671 = vmatprep.mubr.bf16.mxu0 0
      %1672 = vmatmul.mubr.bf16.gmra.mrb[0].mxu0 %v1606
      %v1673 = vpop.f32.mrb[0].mxu0
      %v1674 = vadd.f32 %v1572, %v1673
      %v1675 = vpop.f32.mrb[0].mxu0
      %v1676 = vpop.f32.mrb[0].mxu0
      %v1677 = vadd.f32 %v1572, %v1676
      %v1678 = vpop.f32.mrb[0].mxu0
      %1679 = vmatprep.mubr.bf16.mxu0 0
      %1680 = vmatmul.mubr.bf16.gmra.mrb[0].mxu0 %v1609
      %v1681 = vpop.f32.mrb[0].mxu0
      %v1682 = vadd.f32 %v1572, %v1681
      %v1683 = vpop.f32.mrb[0].mxu0
      %v1684 = vpop.f32.mrb[0].mxu0
      %v1685 = vadd.f32 %v1572, %v1684
      %v1686 = vpop.f32.mrb[0].mxu0
      %1687 = vmatprep.mubr.bf16.mxu0 0
      %1688 = vmatmul.mubr.bf16.gmra.mrb[0].mxu0 %v1612
      %v1689 = vpop.f32.mrb[0].mxu0
      %v1690 = vadd.f32 %v1572, %v1689
      %v1691 = vpop.f32.mrb[0].mxu0
      %v1692 = vpop.f32.mrb[0].mxu0
      %v1693 = vadd.f32 %v1572, %v1692
      %v1694 = vpop.f32.mrb[0].mxu0
      %1695 = vmatprep.mubr.bf16.mxu0 0
      %1696 = vmatmul.mubr.bf16.gmra.mrb[0].mxu0 %v1615
      %v1697 = vpop.f32.mrb[0].mxu0
      %v1698 = vadd.f32 %v1572, %v1697
      %v1699 = vpop.f32.mrb[0].mxu0
      %v1700 = vpop.f32.mrb[0].mxu0
      %v1701 = vadd.f32 %v1572, %v1700
      %v1702 = vpop.f32.mrb[0].mxu0
      %1703 = vmatprep.mubr.bf16.mxu0 0
      %1704 = vmatmul.mubr.bf16.gmra.mrb[0].mxu0 %v1618
      %v1705 = vpop.f32.mrb[0].mxu0
      %v1706 = vadd.f32 %v1572, %v1705
      %v1707 = vpop.f32.mrb[0].mxu0
      %v1708 = vpop.f32.mrb[0].mxu0
      %v1709 = vadd.f32 %v1572, %v1708
      %v1710 = vpop.f32.mrb[0].mxu0
      %1711 = vmatprep.mubr.bf16.mxu0 0
      %1712 = vmatmul.mubr.bf16.gmra.mrb[0].mxu0 %v1621
      %v1713 = vpop.f32.mrb[0].mxu0
      %v1714 = vadd.f32 %v1572, %v1713
      %v1715 = vpop.f32.mrb[0].mxu0
      %v1716 = vpop.f32.mrb[0].mxu0
      %v1717 = vadd.f32 %v1572, %v1716
      %v1718 = vpop.f32.mrb[0].mxu0
      %1719 = vdwg.mxu0
      %v1720 = vmax.f32 %v1658, 0.0
      %v1721 = vmax.f32 %v1661, 0.0
      %v1722 = vmax.f32 %v1666, 0.0
      %v1723 = vmax.f32 %v1669, 0.0
      %v1724 = vmax.f32 %v1674, 0.0
      %v1725 = vmax.f32 %v1677, 0.0
      %v1726 = vmax.f32 %v1682, 0.0
      %v1727 = vmax.f32 %v1685, 0.0
      %v1728 = vmax.f32 %v1690, 0.0
      %v1729 = vmax.f32 %v1693, 0.0
      %v1730 = vmax.f32 %v1698, 0.0
      %v1731 = vmax.f32 %v1701, 0.0
      %v1732 = vmax.f32 %v1706, 0.0
      %v1733 = vmax.f32 %v1709, 0.0
      %v1734 = vmax.f32 %v1714, 0.0
      %v1735 = vmax.f32 %v1717, 0.0
      %v1736 = vpack.c.bf16 %v1721, %v1720
      %v1737 = vpack.c.bf16 %v1723, %v1722
      %v1738 = vpack.c.bf16 %v1725, %v1724
      %v1739 = vpack.c.bf16 %v1727, %v1726
      %v1740 = vpack.c.bf16 %v1729, %v1728
      %v1741 = vpack.c.bf16 %v1731, %v1730
      %v1742 = vpack.c.bf16 %v1733, %v1732
      %v1743 = vpack.c.bf16 %v1735, %v1734
      %v1744 = vld [vmem:[%s5] sm:$0xf]
      %v1745 = vld [vmem:[%s5 + $0x4] sm:$0xf]
      %v1746 = vld [vmem:[%s5 + $0x8] sm:$0xf]
      %v1747 = vld [vmem:[%s5 + $0xc] sm:$0xf]
      %v1748 = vld [vmem:[%s5 + $0x10] sm:$0xf]
      %v1749 = vld [vmem:[%s5 + $0x14] sm:$0xf]
      %v1750 = vld [vmem:[%s5 + $0x18] sm:$0xf]
      %v1751 = vld [vmem:[%s5 + $0x1c] sm:$0xf]
      %v1752 = vld [vmem:[%s6] sm:$0x1]
      %v1754 = vlaneseq
      %v1755 = vshrl.u32 %v1754, 7
      %v1756 = vsub.s32 0, %v1755
      %v1757 = vrot.slane %v1752, %v1756
      %v1767 = vunpack.c.l.b16 %v1744
      %v1768 = vunpack.c.l.b16 %v1745
      %v1769 = vunpack.c.l.b16 %v1746
      %v1770 = vunpack.c.l.b16 %v1747
      %v1771 = vunpack.c.l.b16 %v1748
      %v1772 = vunpack.c.l.b16 %v1749
      %v1773 = vunpack.c.l.b16 %v1750
      %v1774 = vunpack.c.l.b16 %v1751
      %v1775 = vpack.c.b16 %v1768, %v1767
      %v1776 = vpack.c.b16 %v1770, %v1769
      %v1777 = vpack.c.b16 %v1772, %v1771
      %v1778 = vpack.c.b16 %v1774, %v1773
      %v1784 = vsel %vm1598, %v1736, 0
      %v1787 = vsel %vm1598, %v1737, 0
      %v1790 = vsel %vm1598, %v1738, 0
      %v1793 = vsel %vm1598, %v1739, 0
      %v1796 = vsel %vm1598, %v1740, 0
      %v1799 = vsel %vm1598, %v1741, 0
      %v1802 = vsel %vm1598, %v1742, 0
      %v1805 = vsel %vm1598, %v1743, 0
      %1807 = vmatprep.subr.bf16.mxu0 0
      %1808 = vmatpush1.bf16.msra.mxu0 %v1775
      %1809 = vmatprep.subr.bf16.mxu0 0
      %1810 = vmatpush1.bf16.msra.mxu0 %v1776
      %1811 = vmatprep.subr.bf16.mxu0 0
      %1812 = vmatpush1.bf16.msra.mxu0 %v1777
      %1813 = vmatprep.subr.bf16.mxu0 0
      %1814 = vmatpush1.bf16.msra.mxu0 %v1778
      %1815 = vmatprep.subr.bf16.mxu0 0
      %1816 = vmatpush1.bf16.msra.mxu0 0
      %1817 = vmatprep.subr.bf16.mxu0 0
      %1818 = vmatpush1.bf16.msra.mxu0 0
      %1819 = vmatprep.subr.bf16.mxu0 0
      %1820 = vmatpush1.bf16.msra.mxu0 0
      %1821 = vmatprep.subr.bf16.mxu0 0
      %1822 = vmatpush1.bf16.msra.mxu0 0
      %1823 = vmatprep.subr.bf16.mxu0 0
      %1824 = vmatpush1.bf16.msra.mxu0 0
      %1825 = vmatprep.subr.bf16.mxu0 0
      %1826 = vmatpush1.bf16.msra.mxu0 0
      %1827 = vmatprep.subr.bf16.mxu0 0
      %1828 = vmatpush1.bf16.msra.mxu0 0
      %1829 = vmatprep.subr.bf16.mxu0 0
      %1830 = vmatpush1.bf16.msra.mxu0 0
      %1831 = vmatprep.subr.bf16.mxu0 0
      %1832 = vmatpush1.bf16.msra.mxu0 0
      %1833 = vmatprep.subr.bf16.mxu0 0
      %1834 = vmatpush1.bf16.msra.mxu0 0
      %1835 = vmatprep.subr.bf16.mxu0 0
      %1836 = vmatpush1.bf16.msra.mxu0 0
      %1837 = vmatprep.subr.bf16.mxu0 0
      %1838 = vmatpush1.bf16.msra.mxu0 0
      %1839 = vmatprep.mubr.bf16.mxu0 0
      %1840 = vmatmul.mubr.bf16.gmra.mrb[0].mxu0 %v1784
      %v1841 = vpop.f32.mrb[0].mxu0
      %v1842 = vadd.f32 %v1757, %v1841
      %v1843 = vpop.f32.mrb[0].mxu0
      %v1844 = vpop.f32.mrb[0].mxu0
      %v1845 = vadd.f32 %v1757, %v1844
      %v1846 = vpop.f32.mrb[0].mxu0
      %1847 = vmatprep.mubr.bf16.mxu0 0
      %1848 = vmatmul.mubr.bf16.gmra.mrb[0].mxu0 %v1787
      %v1849 = vpop.f32.mrb[0].mxu0
      %v1850 = vadd.f32 %v1757, %v1849
      %v1851 = vpop.f32.mrb[0].mxu0
      %v1852 = vpop.f32.mrb[0].mxu0
      %v1853 = vadd.f32 %v1757, %v1852
      %v1854 = vpop.f32.mrb[0].mxu0
      %1855 = vmatprep.mubr.bf16.mxu0 0
      %1856 = vmatmul.mubr.bf16.gmra.mrb[0].mxu0 %v1790
      %v1857 = vpop.f32.mrb[0].mxu0
      %v1858 = vadd.f32 %v1757, %v1857
      %v1859 = vpop.f32.mrb[0].mxu0
      %v1860 = vpop.f32.mrb[0].mxu0
      %v1861 = vadd.f32 %v1757, %v1860
      %v1862 = vpop.f32.mrb[0].mxu0
      %1863 = vmatprep.mubr.bf16.mxu0 0
      %1864 = vmatmul.mubr.bf16.gmra.mrb[0].mxu0 %v1793
      %v1865 = vpop.f32.mrb[0].mxu0
      %v1866 = vadd.f32 %v1757, %v1865
      %v1867 = vpop.f32.mrb[0].mxu0
      %v1868 = vpop.f32.mrb[0].mxu0
      %v1869 = vadd.f32 %v1757, %v1868
      %v1870 = vpop.f32.mrb[0].mxu0
      %1871 = vmatprep.mubr.bf16.mxu0 0
      %1872 = vmatmul.mubr.bf16.gmra.mrb[0].mxu0 %v1796
      %v1873 = vpop.f32.mrb[0].mxu0
      %v1874 = vadd.f32 %v1757, %v1873
      %v1875 = vpop.f32.mrb[0].mxu0
      %v1876 = vpop.f32.mrb[0].mxu0
      %v1877 = vadd.f32 %v1757, %v1876
      %v1878 = vpop.f32.mrb[0].mxu0
      %1879 = vmatprep.mubr.bf16.mxu0 0
      %1880 = vmatmul.mubr.bf16.gmra.mrb[0].mxu0 %v1799
      %v1881 = vpop.f32.mrb[0].mxu0
      %v1882 = vadd.f32 %v1757, %v1881
      %v1883 = vpop.f32.mrb[0].mxu0
      %v1884 = vpop.f32.mrb[0].mxu0
      %v1885 = vadd.f32 %v1757, %v1884
      %v1886 = vpop.f32.mrb[0].mxu0
      %1887 = vmatprep.mubr.bf16.mxu0 0
      %1888 = vmatmul.mubr.bf16.gmra.mrb[0].mxu0 %v1802
      %v1889 = vpop.f32.mrb[0].mxu0
      %v1890 = vadd.f32 %v1757, %v1889
      %v1891 = vpop.f32.mrb[0].mxu0
      %v1892 = vpop.f32.mrb[0].mxu0
      %v1893 = vadd.f32 %v1757, %v1892
      %v1894 = vpop.f32.mrb[0].mxu0
      %1895 = vmatprep.mubr.bf16.mxu0 0
      %1896 = vmatmul.mubr.bf16.gmra.mrb[0].mxu0 %v1805
      %v1897 = vpop.f32.mrb[0].mxu0
      %v1898 = vadd.f32 %v1757, %v1897
      %v1899 = vpop.f32.mrb[0].mxu0
      %v1900 = vpop.f32.mrb[0].mxu0
      %v1901 = vadd.f32 %v1757, %v1900
      %v1902 = vpop.f32.mrb[0].mxu0
      %1903 = vdwg.mxu0
      %v1904 = vmax.f32 %v1842, 0.0
      %v1905 = vmax.f32 %v1845, 0.0
      %v1906 = vmax.f32 %v1850, 0.0
      %v1907 = vmax.f32 %v1853, 0.0
      %v1908 = vmax.f32 %v1858, 0.0
      %v1909 = vmax.f32 %v1861, 0.0
      %v1910 = vmax.f32 %v1866, 0.0
      %v1911 = vmax.f32 %v1869, 0.0
      %v1912 = vmax.f32 %v1874, 0.0
      %v1913 = vmax.f32 %v1877, 0.0
      %v1914 = vmax.f32 %v1882, 0.0
      %v1915 = vmax.f32 %v1885, 0.0
      %v1916 = vmax.f32 %v1890, 0.0
      %v1917 = vmax.f32 %v1893, 0.0
      %v1918 = vmax.f32 %v1898, 0.0
      %v1919 = vmax.f32 %v1901, 0.0
      %v1920 = vpack.c.bf16 %v1905, %v1904
      %v1921 = vpack.c.bf16 %v1907, %v1906
      %v1922 = vpack.c.bf16 %v1909, %v1908
      %v1923 = vpack.c.bf16 %v1911, %v1910
      %v1924 = vpack.c.bf16 %v1913, %v1912
      %v1925 = vpack.c.bf16 %v1915, %v1914
      %v1926 = vpack.c.bf16 %v1917, %v1916
      %v1927 = vpack.c.bf16 %v1919, %v1918
      %v1928 = vld [vmem:[%s7] sm:$0xf]
      %v1929 = vld [vmem:[%s7 + $0x4] sm:$0xf]
      %v1930 = vld [vmem:[%s7 + $0x8] sm:$0xf]
      %v1931 = vld [vmem:[%s7 + $0xc] sm:$0xf]
      %v1932 = vld [vmem:[%s7 + $0x10] sm:$0xf]
      %v1933 = vld [vmem:[%s7 + $0x14] sm:$0xf]
      %v1934 = vld [vmem:[%s7 + $0x18] sm:$0xf]
      %v1935 = vld [vmem:[%s7 + $0x1c] sm:$0xf]
      %v1936 = vld [vmem:[%s8] sm:$0x1]
      %v1938 = vlaneseq
      %v1939 = vshrl.u32 %v1938, 7
      %v1940 = vsub.s32 0, %v1939
      %v1941 = vrot.slane %v1936, %v1940
      %v1951 = vunpack.c.l.b16 %v1928
      %v1952 = vunpack.c.l.b16 %v1929
      %v1953 = vunpack.c.l.b16 %v1930
      %v1954 = vunpack.c.l.b16 %v1931
      %v1955 = vunpack.c.l.b16 %v1932
      %v1956 = vunpack.c.l.b16 %v1933
      %v1957 = vunpack.c.l.b16 %v1934
      %v1958 = vunpack.c.l.b16 %v1935
      %v1959 = vpack.c.b16 %v1952, %v1951
      %v1960 = vpack.c.b16 %v1954, %v1953
      %v1961 = vpack.c.b16 %v1956, %v1955
      %v1962 = vpack.c.b16 %v1958, %v1957
      %v1968 = vsel %vm1598, %v1920, 0
      %v1971 = vsel %vm1598, %v1921, 0
      %v1974 = vsel %vm1598, %v1922, 0
      %v1977 = vsel %vm1598, %v1923, 0
      %v1980 = vsel %vm1598, %v1924, 0
      %v1983 = vsel %vm1598, %v1925, 0
      %v1986 = vsel %vm1598, %v1926, 0
      %v1989 = vsel %vm1598, %v1927, 0
      %1991 = vmatprep.subr.bf16.mxu0 0
      %1992 = vmatpush1.bf16.msra.mxu0 %v1959
      %1993 = vmatprep.subr.bf16.mxu0 0
      %1994 = vmatpush1.bf16.msra.mxu0 %v1960
      %1995 = vmatprep.subr.bf16.mxu0 0
      %1996 = vmatpush1.bf16.msra.mxu0 %v1961
      %1997 = vmatprep.subr.bf16.mxu0 0
      %1998 = vmatpush1.bf16.msra.mxu0 %v1962
      %1999 = vmatprep.subr.bf16.mxu0 0
      %2000 = vmatpush1.bf16.msra.mxu0 0
      %2001 = vmatprep.subr.bf16.mxu0 0
      %2002 = vmatpush1.bf16.msra.mxu0 0
      %2003 = vmatprep.subr.bf16.mxu0 0
      %2004 = vmatpush1.bf16.msra.mxu0 0
      %2005 = vmatprep.subr.bf16.mxu0 0
      %2006 = vmatpush1.bf16.msra.mxu0 0
      %2007 = vmatprep.subr.bf16.mxu0 0
      %2008 = vmatpush1.bf16.msra.mxu0 0
      %2009 = vmatprep.subr.bf16.mxu0 0
      %2010 = vmatpush1.bf16.msra.mxu0 0
      %2011 = vmatprep.subr.bf16.mxu0 0
      %2012 = vmatpush1.bf16.msra.mxu0 0
      %2013 = vmatprep.subr.bf16.mxu0 0
      %2014 = vmatpush1.bf16.msra.mxu0 0
      %2015 = vmatprep.subr.bf16.mxu0 0
      %2016 = vmatpush1.bf16.msra.mxu0 0
      %2017 = vmatprep.subr.bf16.mxu0 0
      %2018 = vmatpush1.bf16.msra.mxu0 0
      %2019 = vmatprep.subr.bf16.mxu0 0
      %2020 = vmatpush1.bf16.msra.mxu0 0
      %2021 = vmatprep.subr.bf16.mxu0 0
      %2022 = vmatpush1.bf16.msra.mxu0 0
      %2023 = vmatprep.mubr.bf16.mxu0 0
      %2024 = vmatmul.mubr.bf16.gmra.mrb[0].mxu0 %v1968
      %v2025 = vpop.f32.mrb[0].mxu0
      %v2026 = vadd.f32 %v1941, %v2025
      %v2027 = vpop.f32.mrb[0].mxu0
      %v2028 = vpop.f32.mrb[0].mxu0
      %v2029 = vadd.f32 %v1941, %v2028
      %v2030 = vpop.f32.mrb[0].mxu0
      %2031 = vmatprep.mubr.bf16.mxu0 0
      %2032 = vmatmul.mubr.bf16.gmra.mrb[0].mxu0 %v1971
      %v2033 = vpop.f32.mrb[0].mxu0
      %v2034 = vadd.f32 %v1941, %v2033
      %v2035 = vpop.f32.mrb[0].mxu0
      %v2036 = vpop.f32.mrb[0].mxu0
      %v2037 = vadd.f32 %v1941, %v2036
      %v2038 = vpop.f32.mrb[0].mxu0
      %2039 = vmatprep.mubr.bf16.mxu0 0
      %2040 = vmatmul.mubr.bf16.gmra.mrb[0].mxu0 %v1974
      %v2041 = vpop.f32.mrb[0].mxu0
      %v2042 = vadd.f32 %v1941, %v2041
      %v2043 = vpop.f32.mrb[0].mxu0
      %v2044 = vpop.f32.mrb[0].mxu0
      %v2045 = vadd.f32 %v1941, %v2044
      %v2046 = vpop.f32.mrb[0].mxu0
      %2047 = vmatprep.mubr.bf16.mxu0 0
      %2048 = vmatmul.mubr.bf16.gmra.mrb[0].mxu0 %v1977
      %v2049 = vpop.f32.mrb[0].mxu0
      %v2050 = vadd.f32 %v1941, %v2049
      %v2051 = vpop.f32.mrb[0].mxu0
      %v2052 = vpop.f32.mrb[0].mxu0
      %v2053 = vadd.f32 %v1941, %v2052
      %v2054 = vpop.f32.mrb[0].mxu0
      %2055 = vmatprep.mubr.bf16.mxu0 0
      %2056 = vmatmul.mubr.bf16.gmra.mrb[0].mxu0 %v1980
      %v2057 = vpop.f32.mrb[0].mxu0
      %v2058 = vadd.f32 %v1941, %v2057
      %v2059 = vpop.f32.mrb[0].mxu0
      %v2060 = vpop.f32.mrb[0].mxu0
      %v2061 = vadd.f32 %v1941, %v2060
      %v2062 = vpop.f32.mrb[0].mxu0
      %2063 = vmatprep.mubr.bf16.mxu0 0
      %2064 = vmatmul.mubr.bf16.gmra.mrb[0].mxu0 %v1983
      %v2065 = vpop.f32.mrb[0].mxu0
      %v2066 = vadd.f32 %v1941, %v2065
      %v2067 = vpop.f32.mrb[0].mxu0
      %v2068 = vpop.f32.mrb[0].mxu0
      %v2069 = vadd.f32 %v1941, %v2068
      %v2070 = vpop.f32.mrb[0].mxu0
      %2071 = vmatprep.mubr.bf16.mxu0 0
      %2072 = vmatmul.mubr.bf16.gmra.mrb[0].mxu0 %v1986
      %v2073 = vpop.f32.mrb[0].mxu0
      %v2074 = vadd.f32 %v1941, %v2073
      %v2075 = vpop.f32.mrb[0].mxu0
      %v2076 = vpop.f32.mrb[0].mxu0
      %v2077 = vadd.f32 %v1941, %v2076
      %v2078 = vpop.f32.mrb[0].mxu0
      %2079 = vmatprep.mubr.bf16.mxu0 0
      %2080 = vmatmul.mubr.bf16.gmra.mrb[0].mxu0 %v1989
      %v2081 = vpop.f32.mrb[0].mxu0
      %v2082 = vadd.f32 %v1941, %v2081
      %v2083 = vpop.f32.mrb[0].mxu0
      %v2084 = vpop.f32.mrb[0].mxu0
      %v2085 = vadd.f32 %v1941, %v2084
      %v2086 = vpop.f32.mrb[0].mxu0
      %2087 = vdwg.mxu0
      %2088 = vmax.xlane.f32.xlu0 %v2026
      %v2089 = vpop.xlane.xlu0 %2088
      %2090 = vmax.xlane.f32.xlu0 %v2029
      %v2091 = vpop.xlane.xlu0 %2090
      %2092 = vmax.xlane.f32.xlu0 %v2034
      %v2093 = vpop.xlane.xlu0 %2092
      %2094 = vmax.xlane.f32.xlu0 %v2037
      %v2095 = vpop.xlane.xlu0 %2094
      %2096 = vmax.xlane.f32.xlu0 %v2042
      %v2097 = vpop.xlane.xlu0 %2096
      %2098 = vmax.xlane.f32.xlu0 %v2045
      %v2099 = vpop.xlane.xlu0 %2098
      %2100 = vmax.xlane.f32.xlu0 %v2050
      %v2101 = vpop.xlane.xlu0 %2100
      %2102 = vmax.xlane.f32.xlu0 %v2053
      %v2103 = vpop.xlane.xlu0 %2102
      %2104 = vmax.xlane.f32.xlu0 %v2058
      %v2105 = vpop.xlane.xlu0 %2104
      %2106 = vmax.xlane.f32.xlu0 %v2061
      %v2107 = vpop.xlane.xlu0 %2106
      %2108 = vmax.xlane.f32.xlu0 %v2066
      %v2109 = vpop.xlane.xlu0 %2108
      %2110 = vmax.xlane.f32.xlu0 %v2069
      %v2111 = vpop.xlane.xlu0 %2110
      %2112 = vmax.xlane.f32.xlu0 %v2074
      %v2113 = vpop.xlane.xlu0 %2112
      %2114 = vmax.xlane.f32.xlu0 %v2077
      %v2115 = vpop.xlane.xlu0 %2114
      %2116 = vmax.xlane.f32.xlu0 %v2082
      %v2117 = vpop.xlane.xlu0 %2116
      %2118 = vmax.xlane.f32.xlu0 %v2085
      %v2119 = vpop.xlane.xlu0 %2118
      %v2120 = vsub.f32 %v2026, %v2089
      %v2121 = vsub.f32 %v2029, %v2091
      %v2122 = vsub.f32 %v2034, %v2093
      %v2123 = vsub.f32 %v2037, %v2095
      %v2124 = vsub.f32 %v2042, %v2097
      %v2125 = vsub.f32 %v2045, %v2099
      %v2126 = vsub.f32 %v2050, %v2101
      %v2127 = vsub.f32 %v2053, %v2103
      %v2128 = vsub.f32 %v2058, %v2105
      %v2129 = vsub.f32 %v2061, %v2107
      %v2130 = vsub.f32 %v2066, %v2109
      %v2131 = vsub.f32 %v2069, %v2111
      %v2132 = vsub.f32 %v2074, %v2113
      %v2133 = vsub.f32 %v2077, %v2115
      %v2134 = vsub.f32 %v2082, %v2117
      %v2135 = vsub.f32 %v2085, %v2119
      %v2136 = vmul.f32 %v2120, 1.442695
      %v2137 = vpow.pop %v2136
      %v2138 = vmul.f32 %v2121, 1.442695
      %v2139 = vpow.pop %v2138
      %v2140 = vmul.f32 %v2122, 1.442695
      %v2141 = vpow.pop %v2140
      %v2142 = vmul.f32 %v2123, 1.442695
      %v2143 = vpow.pop %v2142
      %v2144 = vmul.f32 %v2124, 1.442695
      %v2145 = vpow.pop %v2144
      %v2146 = vmul.f32 %v2125, 1.442695
      %v2147 = vpow.pop %v2146
      %v2148 = vmul.f32 %v2126, 1.442695
      %v2149 = vpow.pop %v2148
      %v2150 = vmul.f32 %v2127, 1.442695
      %v2151 = vpow.pop %v2150
      %v2152 = vmul.f32 %v2128, 1.442695
      %v2153 = vpow.pop %v2152
      %v2154 = vmul.f32 %v2129, 1.442695
      %v2155 = vpow.pop %v2154
      %v2156 = vmul.f32 %v2130, 1.442695
      %v2157 = vpow.pop %v2156
      %v2158 = vmul.f32 %v2131, 1.442695
      %v2159 = vpow.pop %v2158
      %v2160 = vmul.f32 %v2132, 1.442695
      %v2161 = vpow.pop %v2160
      %v2162 = vmul.f32 %v2133, 1.442695
      %v2163 = vpow.pop %v2162
      %v2164 = vmul.f32 %v2134, 1.442695
      %v2165 = vpow.pop %v2164
      %v2166 = vmul.f32 %v2135, 1.442695
      %v2167 = vpow.pop %v2166
      %2168 = vadd.xlane.f32.xlu0 %v2137
      %v2169 = vpop.xlane.xlu0 %2168
      %2170 = vadd.xlane.f32.xlu0 %v2139
      %v2171 = vpop.xlane.xlu0 %2170
      %2172 = vadd.xlane.f32.xlu0 %v2141
      %v2173 = vpop.xlane.xlu0 %2172
      %2174 = vadd.xlane.f32.xlu0 %v2143
      %v2175 = vpop.xlane.xlu0 %2174
      %2176 = vadd.xlane.f32.xlu0 %v2145
      %v2177 = vpop.xlane.xlu0 %2176
      %2178 = vadd.xlane.f32.xlu0 %v2147
      %v2179 = vpop.xlane.xlu0 %2178
      %2180 = vadd.xlane.f32.xlu0 %v2149
      %v2181 = vpop.xlane.xlu0 %2180
      %2182 = vadd.xlane.f32.xlu0 %v2151
      %v2183 = vpop.xlane.xlu0 %2182
      %2184 = vadd.xlane.f32.xlu0 %v2153
      %v2185 = vpop.xlane.xlu0 %2184
      %2186 = vadd.xlane.f32.xlu0 %v2155
      %v2187 = vpop.xlane.xlu0 %2186
      %2188 = vadd.xlane.f32.xlu0 %v2157
      %v2189 = vpop.xlane.xlu0 %2188
      %2190 = vadd.xlane.f32.xlu0 %v2159
      %v2191 = vpop.xlane.xlu0 %2190
      %2192 = vadd.xlane.f32.xlu0 %v2161
      %v2193 = vpop.xlane.xlu0 %2192
      %2194 = vadd.xlane.f32.xlu0 %v2163
      %v2195 = vpop.xlane.xlu0 %2194
      %2196 = vadd.xlane.f32.xlu0 %v2165
      %v2197 = vpop.xlane.xlu0 %2196
      %2198 = vadd.xlane.f32.xlu0 %v2167
      %v2199 = vpop.xlane.xlu0 %2198
      %v2200 = vlog2.pop %v2169
      %v2201 = vmul.f32 %v2200, 0.6931472
      %v2202 = vlog2.pop %v2171
      %v2203 = vmul.f32 %v2202, 0.6931472
      %v2204 = vlog2.pop %v2173
      %v2205 = vmul.f32 %v2204, 0.6931472
      %v2206 = vlog2.pop %v2175
      %v2207 = vmul.f32 %v2206, 0.6931472
      %v2208 = vlog2.pop %v2177
      %v2209 = vmul.f32 %v2208, 0.6931472
      %v2210 = vlog2.pop %v2179
      %v2211 = vmul.f32 %v2210, 0.6931472
      %v2212 = vlog2.pop %v2181
      %v2213 = vmul.f32 %v2212, 0.6931472
      %v2214 = vlog2.pop %v2183
      %v2215 = vmul.f32 %v2214, 0.6931472
      %v2216 = vlog2.pop %v2185
      %v2217 = vmul.f32 %v2216, 0.6931472
      %v2218 = vlog2.pop %v2187
      %v2219 = vmul.f32 %v2218, 0.6931472
      %v2220 = vlog2.pop %v2189
      %v2221 = vmul.f32 %v2220, 0.6931472
      %v2222 = vlog2.pop %v2191
      %v2223 = vmul.f32 %v2222, 0.6931472
      %v2224 = vlog2.pop %v2193
      %v2225 = vmul.f32 %v2224, 0.6931472
      %v2226 = vlog2.pop %v2195
      %v2227 = vmul.f32 %v2226, 0.6931472
      %v2228 = vlog2.pop %v2197
      %v2229 = vmul.f32 %v2228, 0.6931472
      %v2230 = vlog2.pop %v2199
      %v2231 = vmul.f32 %v2230, 0.6931472
      %v2232 = vadd.f32 %v2201, %v2089
      %v2233 = vadd.f32 %v2203, %v2091
      %v2234 = vadd.f32 %v2205, %v2093
      %v2235 = vadd.f32 %v2207, %v2095
      %v2236 = vadd.f32 %v2209, %v2097
      %v2237 = vadd.f32 %v2211, %v2099
      %v2238 = vadd.f32 %v2213, %v2101
      %v2239 = vadd.f32 %v2215, %v2103
      %v2240 = vadd.f32 %v2217, %v2105
      %v2241 = vadd.f32 %v2219, %v2107
      %v2242 = vadd.f32 %v2221, %v2109
      %v2243 = vadd.f32 %v2223, %v2111
      %v2244 = vadd.f32 %v2225, %v2113
      %v2245 = vadd.f32 %v2227, %v2115
      %v2246 = vadd.f32 %v2229, %v2117
      %v2247 = vadd.f32 %v2231, %v2119
      %v2248 = vsub.f32 %v2026, %v2232
      %v2249 = vsub.f32 %v2029, %v2233
      %v2250 = vsub.f32 %v2034, %v2234
      %v2251 = vsub.f32 %v2037, %v2235
      %v2252 = vsub.f32 %v2042, %v2236
      %v2253 = vsub.f32 %v2045, %v2237
      %v2254 = vsub.f32 %v2050, %v2238
      %v2255 = vsub.f32 %v2053, %v2239
      %v2256 = vsub.f32 %v2058, %v2240
      %v2257 = vsub.f32 %v2061, %v2241
      %v2258 = vsub.f32 %v2066, %v2242
      %v2259 = vsub.f32 %v2069, %v2243
      %v2260 = vsub.f32 %v2074, %v2244
      %v2261 = vsub.f32 %v2077, %v2245
      %v2262 = vsub.f32 %v2082, %v2246
      %v2263 = vsub.f32 %v2085, %v2247
      %2264 = vst [vmem:[%s337] sm:$0xff] %v2248
      %2265 = vst [vmem:[%s337 + $0x8] sm:$0xff] %v2249
      %2266 = vst [vmem:[%s337 + $0x10] sm:$0xff] %v2250
      %2267 = vst [vmem:[%s337 + $0x18] sm:$0xff] %v2251
      %2268 = vst [vmem:[%s337 + $0x20] sm:$0xff] %v2252
      %2269 = vst [vmem:[%s337 + $0x28] sm:$0xff] %v2253
      %2270 = vst [vmem:[%s337 + $0x30] sm:$0xff] %v2254
      %2271 = vst [vmem:[%s337 + $0x38] sm:$0xff] %v2255
      %2272 = vst [vmem:[%s337 + $0x40] sm:$0xff] %v2256
      %2273 = vst [vmem:[%s337 + $0x48] sm:$0xff] %v2257
      %2274 = vst [vmem:[%s337 + $0x50] sm:$0xff] %v2258
      %2275 = vst [vmem:[%s337 + $0x58] sm:$0xff] %v2259
      %2276 = vst [vmem:[%s337 + $0x60] sm:$0xff] %v2260
      %2277 = vst [vmem:[%s337 + $0x68] sm:$0xff] %v2261
      %2278 = vst [vmem:[%s337 + $0x70] sm:$0xff] %v2262
      %2279 = vst [vmem:[%s337 + $0x78] sm:$0xff] %v2263
      %s2280 = smul.u32 16, %s20
      %p2281 = scmp.lt.s32.totalorder %s2280, 47
      %s2282 = scalar_select %p2281, %s2280, 47
      %s2283 = smul.addr %s2282, 8
      %s2284 = scalar_lea.vmem %s9, %s2283
      // Predicated region
      $region57: #{net_forward.1} parent=55 // pred_check
        %p2285 = pneg %p232
      $region58: #{net_forward.1} parent=55 // pred_check_branch
        %2287 = sbr.rel (%p2285) target = $region60
      $region59: #{net_forward.1} parent=55 // pred_region
        %s2288 = smul.u32 16, %s20
      $region60: #{net_forward.1} parent=55 // pred_fallthru
        _
    $region56: #{net_forward.1} parent=5 // pred_fallthru
      _
    %p2289 = scmp.le.s32.totalorder 2, %s15
    // Predicated region
    $region61: #{net_forward.1} parent=5 // pred_check
      %p2290 = pneg %p2289
    $region62: #{net_forward.1} parent=5 // pred_check_branch
      %2292 = sbr.rel (%p2290) target = $region64
    $region63: #{net_forward.1} parent=5 // pred_region
      %s2293 = ssub.s32 %s15, 2
      // Predicated region
      $region65: #{net_forward.1} parent=63 // pred_check
        %p2294 = pneg %p238
      $region66: #{net_forward.1} parent=63 // pred_check_branch
        %2296 = sbr.rel (%p2294) target = $region68
      $region67: #{net_forward.1} parent=63 // pred_region
        %s2297 = smul.u32 16, %s21
        %p2298 = scmp.lt.s32.totalorder %s2297, 47
        %s2299 = scalar_select %p2298, %s2297, 47
        %s2300 = smul.addr %s2299, 8
        %s2301 = scalar_lea.vmem %s9, %s2300
      $region68: #{net_forward.1} parent=63 // pred_fallthru
        _
    $region64: #{net_forward.1} parent=5 // pred_fallthru
      _
  $region6: #{net_forward.1} parent=0 // loop_footer
    %s19 = sadd.s32 1, %s15
  $region7: #{net_forward.1} parent=0 // loop_footer_branch
    %14 = sbr.rel target = $region3
  $region8: #{net_forward.1} parent=0 // loop_exit
    _

</llo_original>
